<compile_context>
chip_gen: v7x
topology: tpu7x:2x2x1
jax: 0.10.0
libtpu: 0.0.40
codegen_flags: <defaults>
</compile_context>

<pallas_src>
import functools

import jax
import jax.numpy as jnp
from jax.experimental import pallas as pl
from jax.experimental.pallas import tpu as pltpu


_VMEM_LIMIT_BYTES = 48 * 1024 * 1024   # explicit scoped-VMEM limit (safe on v5e/v6e/v7x)
_TILE_VMEM_BUDGET = 16 * 1024 * 1024   # per-step budget used for auto tile-row selection


def _vmem_bytes_estimate(TH, W, Cin, Cout, in_dtype, compute_dtype, out_dtype):
    """Rough per-grid-step VMEM footprint (double-buffered blocks + scratch)."""
    ib = jnp.dtype(in_dtype).itemsize
    cb = jnp.dtype(compute_dtype).itemsize
    ob = jnp.dtype(out_dtype).itemsize
    main_in = 2 * TH * W * Cin * ib          # input row tile, double buffered
    halos = 2 * 2 * W * Cin * ib             # top + bottom halo rows, double buffered
    weight = 2 * 9 * Cin * Cout * cb         # (9*Cin, Cout) weight matrix
    out_blk = 2 * TH * W * Cout * ob         # output row tile, double buffered
    xp = (TH + 2) * (W + 2) * Cin * cb       # padded staging scratch
    pat = TH * W * 9 * Cin * cb              # im2col patch scratch
    return main_in + halos + weight + out_blk + xp + pat


def _pick_tile_rows(H, W, Cin, Cout, in_dtype, compute_dtype, out_dtype,
                    budget_bytes=_TILE_VMEM_BUDGET):
    """Largest divisor of H whose per-step footprint fits the VMEM budget."""
    best = 1
    for th in range(1, H + 1):
        if H % th:
            continue
        if _vmem_bytes_estimate(th, W, Cin, Cout, in_dtype, compute_dtype,
                                out_dtype) <= budget_bytes:
            best = th
    return best


def _conv3x3_im2col_kernel(xm_ref, xt_ref, xb_ref, w_ref, o_ref, xp_ref, pat_ref,
                           *, TH, W, Cin, Cout):
    """One (batch, row-tile) step.

    xm_ref : (1, TH, W, Cin)  main input rows (auto-pipelined)
    xt_ref : (1, 1,  W, Cin)  row above the tile (clamped at image top)
    xb_ref : (1, 1,  W, Cin)  row below the tile (clamped at image bottom)
    w_ref  : (9*Cin, Cout)    conv weight, K ordered (kh, kw, cin)
    o_ref  : (1, TH, W, Cout) conv output rows
    xp_ref : (TH+2, W+2, Cin) VMEM scratch, spatially padded tile (compute dtype)
    pat_ref: (TH, W, 9*Cin)   VMEM scratch, im2col patches (compute dtype)
    """
    t = pl.program_id(1)
    nt = pl.num_programs(1)
    cdt = xp_ref.dtype

    # --- Stage the padded tile once (single relayout; taps become static slices). ---
    xp_ref[1:TH + 1, 1:W + 1, :] = xm_ref[0].astype(cdt)

    zero_col = jnp.zeros((TH + 2, 1, Cin), dtype=cdt)
    xp_ref[:, 0:1, :] = zero_col                 # left  padding column (pad=1 in W)
    xp_ref[:, W + 1:W + 2, :] = zero_col         # right padding column
    zero_row = jnp.zeros((1, W, Cin), dtype=cdt)

    @pl.when(t > 0)
    def _top_halo():
        xp_ref[0:1, 1:W + 1, :] = xt_ref[0].astype(cdt)

    @pl.when(t == 0)
    def _top_pad():
        xp_ref[0:1, 1:W + 1, :] = zero_row       # pad=1 in H at image top

    @pl.when(t < nt - 1)
    def _bot_halo():
        xp_ref[TH + 1:TH + 2, 1:W + 1, :] = xb_ref[0].astype(cdt)

    @pl.when(t == nt - 1)
    def _bot_pad():
        xp_ref[TH + 1:TH + 2, 1:W + 1, :] = zero_row  # pad=1 in H at image bottom

    # --- im2col: (TH, W, 9*Cin) patches, K ordered (kh, kw, cin) to match w_ref. ---
    for kh in range(3):
        for kw in range(3):
            tap = kh * 3 + kw
            pat_ref[:, :, tap * Cin:(tap + 1) * Cin] = xp_ref[kh:kh + TH, kw:kw + W, :]

    # --- Single MXU matmul, K = 9*Cin, f32 accumulation. ---
    pm = pat_ref[...].reshape(TH * W, 9 * Cin)
    y = jnp.dot(pm, w_ref[...], preferred_element_type=jnp.float32)
    o_ref[...] = y.reshape(1, TH, W, Cout).astype(o_ref.dtype)


def conv3x3_same_nhwc(x_nhwc, w_hwio, *, tile_rows=None, compute_dtype=None):
    """3x3, stride 1, padding 1, no-bias conv. x_nhwc: (N,H,W,Cin) -> (N,H,W,Cout)."""
    N, H, W, Cin = x_nhwc.shape
    Cout = w_hwio.shape[-1]
    out_dtype = x_nhwc.dtype
    if compute_dtype is None:
        compute_dtype = x_nhwc.dtype
    if tile_rows is None:
        tile_rows = _pick_tile_rows(H, W, Cin, Cout, x_nhwc.dtype, compute_dtype,
                                    out_dtype)
    TH = int(tile_rows)
    assert H % TH == 0, (H, TH)
    nt = H // TH

    # Pre-reshape weight to a 2D MXU-ready matrix; constant index_map keeps it resident.
    w2 = w_hwio.reshape(9 * Cin, Cout).astype(compute_dtype)

    kernel = functools.partial(_conv3x3_im2col_kernel, TH=TH, W=W, Cin=Cin, Cout=Cout)

    return pl.pallas_call(
        kernel,
        out_shape=jax.ShapeDtypeStruct((N, H, W, Cout), out_dtype),
        grid_spec=pltpu.PrefetchScalarGridSpec(
            num_scalar_prefetch=0,
            grid=(N, nt),
            in_specs=[
                # main rows of this tile
                pl.BlockSpec((1, TH, W, Cin), lambda n, t: (n, t, 0, 0)),
                # one halo row above (clamped at the top edge; zeroed in-kernel)
                pl.BlockSpec((1, 1, W, Cin),
                             lambda n, t: (n, jnp.maximum(t * TH - 1, 0), 0, 0)),
                # one halo row below (clamped at the bottom edge; zeroed in-kernel)
                pl.BlockSpec((1, 1, W, Cin),
                             lambda n, t: (n, jnp.minimum((t + 1) * TH, H - 1), 0, 0)),
                # weight matrix (VMEM resident)
                pl.BlockSpec((9 * Cin, Cout), lambda n, t: (0, 0)),
            ],
            out_specs=pl.BlockSpec((1, TH, W, Cout), lambda n, t: (n, t, 0, 0)),
            scratch_shapes=[
                pltpu.VMEM((TH + 2, W + 2, Cin), compute_dtype),
                pltpu.VMEM((TH, W, 9 * Cin), compute_dtype),
            ],
        ),
        compiler_params=pltpu.CompilerParams(
            dimension_semantics=("parallel", "parallel"),
            vmem_limit_bytes=_VMEM_LIMIT_BYTES,
        ),
    )(x_nhwc, x_nhwc, x_nhwc, w2)


def downsample_forward(x_nchw, conv_weight_oihw, *, tile_rows=None, compute_dtype=None):
    """Full Downsample forward (PyTorch semantics).

    x_nchw: (N, n_feat, H, W); conv_weight_oihw: (n_feat//2, n_feat, 3, 3).
    Returns (N, 2*n_feat, H//2, W//2).
    """
    # TODO(synk): keep activations NHWC across layers to drop this input transpose.
    x_nhwc = jnp.transpose(x_nchw, (0, 2, 3, 1))
    # OIHW -> HWIO.
    w_hwio = jnp.transpose(conv_weight_oihw, (2, 3, 1, 0))

    y = conv3x3_same_nhwc(x_nhwc, w_hwio, tile_rows=tile_rows,
                          compute_dtype=compute_dtype)          # (N, H, W, Cout) NHWC

    # Fused PixelUnshuffle(2) + NHWC->NCHW: ONE layout pass over the half-size output.
    # out[n, c*4 + i*2 + j, oh, ow] = y[n, 2*oh + i, 2*ow + j, c]  (== torch PixelUnshuffle)
    N, H, W, Cout = y.shape
    y = y.reshape(N, H // 2, 2, W // 2, 2, Cout)
    y = jnp.transpose(y, (0, 5, 2, 4, 1, 3))
    return y.reshape(N, Cout * 4, H // 2, W // 2)


def _pixel_unshuffle_ref(x, r=2):
    """Reference torch.nn.PixelUnshuffle(r) on NCHW input."""
    N, C, H, W = x.shape
    x = x.reshape(N, C, H // r, r, W // r, r)
    x = jnp.transpose(x, (0, 1, 3, 5, 2, 4))
    return x.reshape(N, C * r * r, H // r, W // r)


if __name__ == "__main__":
    key = jax.random.PRNGKey(0)
    k_x, k_w = jax.random.split(key)

    N, n_feat, H, W = 2, 4, 16, 16
    x = jax.random.normal(k_x, (N, n_feat, H, W), dtype=jnp.float32)
    # Conv weight: (out=n_feat//2, in=n_feat, 3, 3), no bias.
    w = 0.1 * jax.random.normal(k_w, (n_feat // 2, n_feat, 3, 3), dtype=jnp.float32)

    # Reference: XLA conv (same semantics as PyTorch Conv2d NCHW) + PixelUnshuffle(2).
    ref_conv = jax.lax.conv_general_dilated(
        x, w, window_strides=(1, 1), padding=((1, 1), (1, 1)),
        dimension_numbers=("NCHW", "OIHW", "NCHW"))
    ref = _pixel_unshuffle_ref(ref_conv, 2)

    # f32 path with explicit row tiling (grid = (2, 2)) — exercises halo + boundary paths.
    out = downsample_forward(x, w, tile_rows=8)
    out = jax.block_until_ready(out)
    assert out.shape == (N, 2 * n_feat, H // 2, W // 2), out.shape
    assert jnp.allclose(out, ref, atol=1e-4, rtol=1e-4)

    # bf16 MXU-operand path (f32 accumulation), auto tile selection (single row tile).
    out_bf16 = downsample_forward(x, w, compute_dtype=jnp.bfloat16)
    out_bf16 = jax.block_until_ready(out_bf16)
    assert out_bf16.shape == (N, 2 * n_feat, H // 2, W // 2), out_bf16.shape
    assert jnp.allclose(out_bf16, ref, atol=5e-2, rtol=5e-2)

    print("KERNEL_OK")
</pallas_src>

<mosaic_0001>
module attributes {stable_mosaic.version = 11 : i64} {
  func.func @_conv3x3_im2col_kernel(%arg0: i32, %arg1: i32, %arg2: memref<1x8x16x4xf32, #tpu.memory_space<vmem>>, %arg3: memref<1x1x16x4xf32, #tpu.memory_space<vmem>>, %arg4: memref<1x1x16x4xf32, #tpu.memory_space<vmem>>, %arg5: memref<36x2xf32, #tpu.memory_space<vmem>>, %arg6: memref<1x8x16x2xf32, #tpu.memory_space<vmem>>, %arg7: memref<10x18x4xf32, #tpu.memory_space<vmem>>, %arg8: memref<8x16x36xf32, #tpu.memory_space<vmem>>) attributes {dimension_semantics = [#tpu.dimension_semantics<parallel>, #tpu.dimension_semantics<parallel>], iteration_bounds = array<i64: 2, 2>, scalar_prefetch = 0 : i64, scratch_operands = 2 : i64, tpu.core_type = #tpu.core_type<tc>, window_params = [{transform_indices = @transform_0, window_bounds = array<i64: 1, 8, 16, 4>}, {transform_indices = @transform_1, window_bounds = array<i64: 1, 1, 16, 4>}, {transform_indices = @transform_2, window_bounds = array<i64: 1, 1, 16, 4>}, {pipeline_mode = #tpu.pipeline_mode<synchronous>, transform_indices = @transform_3, window_bounds = array<i64: 36, 2>}, {transform_indices = @transform_4, window_bounds = array<i64: 1, 8, 16, 2>}]} {
    %c0 = arith.constant 0 : index
    %c0_0 = arith.constant 0 : index
    %c0_1 = arith.constant 0 : index
    %c0_2 = arith.constant 0 : index
    %0 = vector.load %arg2[%c0, %c0_0, %c0_1, %c0_2] : memref<1x8x16x4xf32, #tpu.memory_space<vmem>>, vector<1x8x16x4xf32>
    %1 = vector.shape_cast %0 : vector<1x8x16x4xf32> to vector<8x16x4xf32>
    %c1 = arith.constant 1 : index
    %c1_3 = arith.constant 1 : index
    %c0_4 = arith.constant 0 : index
    %2 = vector.load %arg7[%c1, %c1_3, %c0_4] : memref<10x18x4xf32, #tpu.memory_space<vmem>>, vector<8x16x4xf32>
    tpu.vector_store %arg7[%c1, %c1_3, %c0_4], %1 {strides = array<i32>} : memref<10x18x4xf32, #tpu.memory_space<vmem>>, vector<8x16x4xf32>,
    %cst = arith.constant 0.000000e+00 : f32
    %3 = vector.broadcast %cst : f32 to vector<10x1x4xf32>
    %c0_5 = arith.constant 0 : index
    %c0_6 = arith.constant 0 : index
    %c0_7 = arith.constant 0 : index
    %4 = vector.load %arg7[%c0_5, %c0_6, %c0_7] : memref<10x18x4xf32, #tpu.memory_space<vmem>>, vector<10x1x4xf32>
    tpu.vector_store %arg7[%c0_5, %c0_6, %c0_7], %3 {strides = array<i32>} : memref<10x18x4xf32, #tpu.memory_space<vmem>>, vector<10x1x4xf32>,
    %c0_8 = arith.constant 0 : index
    %c17 = arith.constant 17 : index
    %c0_9 = arith.constant 0 : index
    %5 = vector.load %arg7[%c0_8, %c17, %c0_9] : memref<10x18x4xf32, #tpu.memory_space<vmem>>, vector<10x1x4xf32>
    tpu.vector_store %arg7[%c0_8, %c17, %c0_9], %3 {strides = array<i32>} : memref<10x18x4xf32, #tpu.memory_space<vmem>>, vector<10x1x4xf32>,
    %cst_10 = arith.constant 0.000000e+00 : f32
    %6 = vector.broadcast %cst_10 : f32 to vector<1x16x4xf32>
    %c0_i32 = arith.constant 0 : i32
    %7 = arith.cmpi sgt, %arg1, %c0_i32 : i32
    %8 = arith.extui %7 : i1 to i32
    %c0_i32_11 = arith.constant 0 : i32
    %9 = arith.cmpi ne, %8, %c0_i32_11 : i32
    scf.if %9 {
      %c0_72 = arith.constant 0 : index
      %c0_73 = arith.constant 0 : index
      %c0_74 = arith.constant 0 : index
      %c0_75 = arith.constant 0 : index
      %43 = vector.load %arg3[%c0_72, %c0_73, %c0_74, %c0_75] : memref<1x1x16x4xf32, #tpu.memory_space<vmem>>, vector<1x1x16x4xf32>
      %44 = vector.shape_cast %43 : vector<1x1x16x4xf32> to vector<1x16x4xf32>
      %c0_76 = arith.constant 0 : index
      %c1_77 = arith.constant 1 : index
      %c0_78 = arith.constant 0 : index
      %45 = vector.load %arg7[%c0_76, %c1_77, %c0_78] : memref<10x18x4xf32, #tpu.memory_space<vmem>>, vector<1x16x4xf32>
      tpu.vector_store %arg7[%c0_76, %c1_77, %c0_78], %44 {strides = array<i32>} : memref<10x18x4xf32, #tpu.memory_space<vmem>>, vector<1x16x4xf32>,
    } else {
    }
    %c0_i32_12 = arith.constant 0 : i32
    %10 = arith.cmpi eq, %arg1, %c0_i32_12 : i32
    %11 = arith.extui %10 : i1 to i32
    %c0_i32_13 = arith.constant 0 : i32
    %12 = arith.cmpi ne, %11, %c0_i32_13 : i32
    scf.if %12 {
      %c0_72 = arith.constant 0 : index
      %c1_73 = arith.constant 1 : index
      %c0_74 = arith.constant 0 : index
      %43 = vector.load %arg7[%c0_72, %c1_73, %c0_74] : memref<10x18x4xf32, #tpu.memory_space<vmem>>, vector<1x16x4xf32>
      tpu.vector_store %arg7[%c0_72, %c1_73, %c0_74], %6 {strides = array<i32>} : memref<10x18x4xf32, #tpu.memory_space<vmem>>, vector<1x16x4xf32>,
    } else {
    }
    %c1_i32 = arith.constant 1 : i32
    %13 = arith.cmpi slt, %arg1, %c1_i32 : i32
    %14 = arith.extui %13 : i1 to i32
    %c0_i32_14 = arith.constant 0 : i32
    %15 = arith.cmpi ne, %14, %c0_i32_14 : i32
    scf.if %15 {
      %c0_72 = arith.constant 0 : index
      %c0_73 = arith.constant 0 : index
      %c0_74 = arith.constant 0 : index
      %c0_75 = arith.constant 0 : index
      %43 = vector.load %arg4[%c0_72, %c0_73, %c0_74, %c0_75] : memref<1x1x16x4xf32, #tpu.memory_space<vmem>>, vector<1x1x16x4xf32>
      %44 = vector.shape_cast %43 : vector<1x1x16x4xf32> to vector<1x16x4xf32>
      %c9 = arith.constant 9 : index
      %c1_76 = arith.constant 1 : index
      %c0_77 = arith.constant 0 : index
      %45 = vector.load %arg7[%c9, %c1_76, %c0_77] : memref<10x18x4xf32, #tpu.memory_space<vmem>>, vector<1x16x4xf32>
      tpu.vector_store %arg7[%c9, %c1_76, %c0_77], %44 {strides = array<i32>} : memref<10x18x4xf32, #tpu.memory_space<vmem>>, vector<1x16x4xf32>,
    } else {
    }
    %c1_i32_15 = arith.constant 1 : i32
    %16 = arith.cmpi eq, %arg1, %c1_i32_15 : i32
    %17 = arith.extui %16 : i1 to i32
    %c0_i32_16 = arith.constant 0 : i32
    %18 = arith.cmpi ne, %17, %c0_i32_16 : i32
    scf.if %18 {
      %c9 = arith.constant 9 : index
      %c1_72 = arith.constant 1 : index
      %c0_73 = arith.constant 0 : index
      %43 = vector.load %arg7[%c9, %c1_72, %c0_73] : memref<10x18x4xf32, #tpu.memory_space<vmem>>, vector<1x16x4xf32>
      tpu.vector_store %arg7[%c9, %c1_72, %c0_73], %6 {strides = array<i32>} : memref<10x18x4xf32, #tpu.memory_space<vmem>>, vector<1x16x4xf32>,
    } else {
    }
    %c0_17 = arith.constant 0 : index
    %c0_18 = arith.constant 0 : index
    %c0_19 = arith.constant 0 : index
    %19 = vector.load %arg7[%c0_17, %c0_18, %c0_19] : memref<10x18x4xf32, #tpu.memory_space<vmem>>, vector<8x16x4xf32>
    %c0_20 = arith.constant 0 : index
    %c0_21 = arith.constant 0 : index
    %c0_22 = arith.constant 0 : index
    %20 = vector.load %arg8[%c0_20, %c0_21, %c0_22] : memref<8x16x36xf32, #tpu.memory_space<vmem>>, vector<8x16x4xf32>
    tpu.vector_store %arg8[%c0_20, %c0_21, %c0_22], %19 {strides = array<i32>} : memref<8x16x36xf32, #tpu.memory_space<vmem>>, vector<8x16x4xf32>,
    %c0_23 = arith.constant 0 : index
    %c1_24 = arith.constant 1 : index
    %c0_25 = arith.constant 0 : index
    %21 = vector.load %arg7[%c0_23, %c1_24, %c0_25] : memref<10x18x4xf32, #tpu.memory_space<vmem>>, vector<8x16x4xf32>
    %c0_26 = arith.constant 0 : index
    %c0_27 = arith.constant 0 : index
    %c4 = arith.constant 4 : index
    %22 = vector.load %arg8[%c0_26, %c0_27, %c4] : memref<8x16x36xf32, #tpu.memory_space<vmem>>, vector<8x16x4xf32>
    tpu.vector_store %arg8[%c0_26, %c0_27, %c4], %21 {strides = array<i32>} : memref<8x16x36xf32, #tpu.memory_space<vmem>>, vector<8x16x4xf32>,
    %c0_28 = arith.constant 0 : index
    %c2 = arith.constant 2 : index
    %c0_29 = arith.constant 0 : index
    %23 = vector.load %arg7[%c0_28, %c2, %c0_29] : memref<10x18x4xf32, #tpu.memory_space<vmem>>, vector<8x16x4xf32>
    %c0_30 = arith.constant 0 : index
    %c0_31 = arith.constant 0 : index
    %c8 = arith.constant 8 : index
    %24 = vector.load %arg8[%c0_30, %c0_31, %c8] : memref<8x16x36xf32, #tpu.memory_space<vmem>>, vector<8x16x4xf32>
    tpu.vector_store %arg8[%c0_30, %c0_31, %c8], %23 {strides = array<i32>} : memref<8x16x36xf32, #tpu.memory_space<vmem>>, vector<8x16x4xf32>,
    %c1_32 = arith.constant 1 : index
    %c0_33 = arith.constant 0 : index
    %c0_34 = arith.constant 0 : index
    %25 = vector.load %arg7[%c1_32, %c0_33, %c0_34] : memref<10x18x4xf32, #tpu.memory_space<vmem>>, vector<8x16x4xf32>
    %c0_35 = arith.constant 0 : index
    %c0_36 = arith.constant 0 : index
    %c12 = arith.constant 12 : index
    %26 = vector.load %arg8[%c0_35, %c0_36, %c12] : memref<8x16x36xf32, #tpu.memory_space<vmem>>, vector<8x16x4xf32>
    tpu.vector_store %arg8[%c0_35, %c0_36, %c12], %25 {strides = array<i32>} : memref<8x16x36xf32, #tpu.memory_space<vmem>>, vector<8x16x4xf32>,
    %c1_37 = arith.constant 1 : index
    %c1_38 = arith.constant 1 : index
    %c0_39 = arith.constant 0 : index
    %27 = vector.load %arg7[%c1_37, %c1_38, %c0_39] : memref<10x18x4xf32, #tpu.memory_space<vmem>>, vector<8x16x4xf32>
    %c0_40 = arith.constant 0 : index
    %c0_41 = arith.constant 0 : index
    %c16 = arith.constant 16 : index
    %28 = vector.load %arg8[%c0_40, %c0_41, %c16] : memref<8x16x36xf32, #tpu.memory_space<vmem>>, vector<8x16x4xf32>
    tpu.vector_store %arg8[%c0_40, %c0_41, %c16], %27 {strides = array<i32>} : memref<8x16x36xf32, #tpu.memory_space<vmem>>, vector<8x16x4xf32>,
    %c1_42 = arith.constant 1 : index
    %c2_43 = arith.constant 2 : index
    %c0_44 = arith.constant 0 : index
    %29 = vector.load %arg7[%c1_42, %c2_43, %c0_44] : memref<10x18x4xf32, #tpu.memory_space<vmem>>, vector<8x16x4xf32>
    %c0_45 = arith.constant 0 : index
    %c0_46 = arith.constant 0 : index
    %c20 = arith.constant 20 : index
    %30 = vector.load %arg8[%c0_45, %c0_46, %c20] : memref<8x16x36xf32, #tpu.memory_space<vmem>>, vector<8x16x4xf32>
    tpu.vector_store %arg8[%c0_45, %c0_46, %c20], %29 {strides = array<i32>} : memref<8x16x36xf32, #tpu.memory_space<vmem>>, vector<8x16x4xf32>,
    %c2_47 = arith.constant 2 : index
    %c0_48 = arith.constant 0 : index
    %c0_49 = arith.constant 0 : index
    %31 = vector.load %arg7[%c2_47, %c0_48, %c0_49] : memref<10x18x4xf32, #tpu.memory_space<vmem>>, vector<8x16x4xf32>
    %c0_50 = arith.constant 0 : index
    %c0_51 = arith.constant 0 : index
    %c24 = arith.constant 24 : index
    %32 = vector.load %arg8[%c0_50, %c0_51, %c24] : memref<8x16x36xf32, #tpu.memory_space<vmem>>, vector<8x16x4xf32>
    tpu.vector_store %arg8[%c0_50, %c0_51, %c24], %31 {strides = array<i32>} : memref<8x16x36xf32, #tpu.memory_space<vmem>>, vector<8x16x4xf32>,
    %c2_52 = arith.constant 2 : index
    %c1_53 = arith.constant 1 : index
    %c0_54 = arith.constant 0 : index
    %33 = vector.load %arg7[%c2_52, %c1_53, %c0_54] : memref<10x18x4xf32, #tpu.memory_space<vmem>>, vector<8x16x4xf32>
    %c0_55 = arith.constant 0 : index
    %c0_56 = arith.constant 0 : index
    %c28 = arith.constant 28 : index
    %34 = vector.load %arg8[%c0_55, %c0_56, %c28] : memref<8x16x36xf32, #tpu.memory_space<vmem>>, vector<8x16x4xf32>
    tpu.vector_store %arg8[%c0_55, %c0_56, %c28], %33 {strides = array<i32>} : memref<8x16x36xf32, #tpu.memory_space<vmem>>, vector<8x16x4xf32>,
    %c2_57 = arith.constant 2 : index
    %c2_58 = arith.constant 2 : index
    %c0_59 = arith.constant 0 : index
    %35 = vector.load %arg7[%c2_57, %c2_58, %c0_59] : memref<10x18x4xf32, #tpu.memory_space<vmem>>, vector<8x16x4xf32>
    %c0_60 = arith.constant 0 : index
    %c0_61 = arith.constant 0 : index
    %c32 = arith.constant 32 : index
    %36 = vector.load %arg8[%c0_60, %c0_61, %c32] : memref<8x16x36xf32, #tpu.memory_space<vmem>>, vector<8x16x4xf32>
    tpu.vector_store %arg8[%c0_60, %c0_61, %c32], %35 {strides = array<i32>} : memref<8x16x36xf32, #tpu.memory_space<vmem>>, vector<8x16x4xf32>,
    %c0_62 = arith.constant 0 : index
    %c0_63 = arith.constant 0 : index
    %c0_64 = arith.constant 0 : index
    %37 = vector.load %arg8[%c0_62, %c0_63, %c0_64] : memref<8x16x36xf32, #tpu.memory_space<vmem>>, vector<8x16x36xf32>
    %38 = vector.shape_cast %37 : vector<8x16x36xf32> to vector<128x36xf32>
    %c0_65 = arith.constant 0 : index
    %c0_66 = arith.constant 0 : index
    %39 = vector.load %arg5[%c0_65, %c0_66] : memref<36x2xf32, #tpu.memory_space<vmem>>, vector<36x2xf32>
    %cst_67 = arith.constant dense<0.000000e+00> : vector<128x2xf32>
    %40 = tpu.matmul %38, %39, %cst_67 {dimension_numbers = #tpu.dot_dimension_numbers<[1], [0], [0], [1], [0, 0, 1, 1], [], []>} : vector<128x36xf32>, vector<36x2xf32>, vector<128x2xf32> -> vector<128x2xf32>
    %41 = vector.shape_cast %40 : vector<128x2xf32> to vector<1x8x16x2xf32>
    %c0_68 = arith.constant 0 : index
    %c0_69 = arith.constant 0 : index
    %c0_70 = arith.constant 0 : index
    %c0_71 = arith.constant 0 : index
    %42 = vector.load %arg6[%c0_68, %c0_69, %c0_70, %c0_71] : memref<1x8x16x2xf32, #tpu.memory_space<vmem>>, vector<1x8x16x2xf32>
    tpu.vector_store %arg6[%c0_68, %c0_69, %c0_70, %c0_71], %41 {strides = array<i32>} : memref<1x8x16x2xf32, #tpu.memory_space<vmem>>, vector<1x8x16x2xf32>,
    return
  }
  func.func @transform_0(%arg0: i32, %arg1: i32) -> (i32, i32, i32, i32) {
    %c0_i32 = arith.constant 0 : i32
    %c0_i32_0 = arith.constant 0 : i32
    %c0_i32_1 = arith.constant 0 : i32
    return %arg0, %arg1, %c0_i32, %c0_i32_0 : i32, i32, i32, i32
  }
  func.func @transform_1(%arg0: i32, %arg1: i32) -> (i32, i32, i32, i32) {
    %c8_i32 = arith.constant 8 : i32
    %0 = arith.muli %arg1, %c8_i32 : i32
    %c1_i32 = arith.constant 1 : i32
    %1 = arith.subi %0, %c1_i32 : i32
    %c0_i32 = arith.constant 0 : i32
    %2 = arith.maxsi %1, %c0_i32 : i32
    %c0_i32_0 = arith.constant 0 : i32
    %c0_i32_1 = arith.constant 0 : i32
    %c0_i32_2 = arith.constant 0 : i32
    return %arg0, %2, %c0_i32_0, %c0_i32_1 : i32, i32, i32, i32
  }
  func.func @transform_2(%arg0: i32, %arg1: i32) -> (i32, i32, i32, i32) {
    %c1_i32 = arith.constant 1 : i32
    %0 = arith.addi %arg1, %c1_i32 : i32
    %c8_i32 = arith.constant 8 : i32
    %1 = arith.muli %0, %c8_i32 : i32
    %c15_i32 = arith.constant 15 : i32
    %2 = arith.minsi %1, %c15_i32 : i32
    %c0_i32 = arith.constant 0 : i32
    %c0_i32_0 = arith.constant 0 : i32
    %c0_i32_1 = arith.constant 0 : i32
    return %arg0, %2, %c0_i32, %c0_i32_0 : i32, i32, i32, i32
  }
  func.func @transform_3(%arg0: i32, %arg1: i32) -> (i32, i32) {
    %c0_i32 = arith.constant 0 : i32
    %c0_i32_0 = arith.constant 0 : i32
    %c0_i32_1 = arith.constant 0 : i32
    return %c0_i32, %c0_i32_0 : i32, i32
  }
  func.func @transform_4(%arg0: i32, %arg1: i32) -> (i32, i32, i32, i32) {
    %c0_i32 = arith.constant 0 : i32
    %c0_i32_0 = arith.constant 0 : i32
    %c0_i32_1 = arith.constant 0 : i32
    return %arg0, %arg1, %c0_i32, %c0_i32_0 : i32, i32, i32, i32
  }
}

</mosaic_0001>

<llo_original>
// kernel: tpu_custom_call.1
$region0: #{tpu_custom_call.1}
  #allocation0 [shape = 'u32[]', space=smem, size = 0x4, offset = 0x4, fixed_abs, tag = 'smem constant byte address 0x4 - core index']
  #allocation1 [shape = 'u32[144,128]{1,0:T(1,128)}', space=vmem, size = 0x12000, scoped, tag = 'internal scratch']
  #allocation2 [shape = 'f32[10,18,4]{2,1,0:T(8,128)}', space=vmem, size = 0x1e000, scoped, tag = 'scratch operand']
  #allocation3 [shape = 'f32[8,16,36]{2,1,0:T(8,128)}', space=vmem, size = 0x10000, scoped, tag = 'scratch operand']
  %s0 = inlined_call_operand.vmem [shape: f32[2,16,16,4], index: 0, kind: input, shape index: {}]
  %s1 = inlined_call_operand.vmem [shape: f32[2,16,16,4], index: 1, kind: input, shape index: {}]
  %s2 = inlined_call_operand.vmem [shape: f32[2,16,16,4], index: 2, kind: input, shape index: {}]
  %s3 = inlined_call_operand.vmem [shape: f32[36,2], index: 3, kind: input, shape index: {}]
  %s4 = inlined_call_operand.vmem [shape: f32[2,16,16,2], index: 4, kind: output, shape index: {}]
  %s5 = sld [smem:[#allocation0]]
  $region65: #{tpu_custom_call.1} parent=0
    _
  %s7 = ssub.s32 1, %s5
  %s8 = scalar_select 0, %s7, %s5
  loop: start=0, step=1, limit=6
  $region2: #{tpu_custom_call.1} parent=0 // loop_pre_header
    _
  $region3: #{tpu_custom_call.1} parent=0 // loop_header
    %s10 = sphi 0, %s14
    %p11 = scmp.ge.s32.totalorder %s10, 6
    %s17 = sphi 0, %s29
    %s18 = sphi 0, %s25
    %s19 = sphi 0, %s17
    %s20 = sphi 0, %s18
    %s21 = sphi 0, %s19
    %s22 = sphi 0, %s20
    %s34 = sphi 0, %s36
    %s37 = sphi 0, %s34
    %s38 = sphi 0, %s37
    %s54 = sphi 0, %s38
    %s70 = sphi 0, %s72
    %s73 = sphi 0, %s70
    %s74 = sphi 0, %s73
    %s90 = sphi 0, %s74
    %s106 = sphi 0, %s108
    %s109 = sphi 0, %s106
    %s110 = sphi 0, %s109
    %s126 = sphi 0, %s110
    %s130 = sphi 0, %s130
    %s132 = sphi 0, %s130
    %s133 = sphi 0, %s132
    %s147 = sphi 0, %s133
    %s155 = sphi 0, %s157
    %s158 = sphi 0, %s155
    %s159 = sphi 0, %s158
    %s175 = sphi 0, %s159
  $region4: #{tpu_custom_call.1} parent=0 // loop_header_branch
    %13 = sbr.rel (%p11) target = $region8
  $region5: #{tpu_custom_call.1} parent=0 // loop_body
    %s15 = ssub.s32 %s10, 1
    %s16 = ssub.s32 %s10, 2
    %s23 = sadd.s32 1, %s18
    %p24 = scmp.ge.s32.totalorder %s23, 2
    %s25 = scalar_select %p24, 0, %s23
    %s26 = sadd.s32 1, %s17
    %s27 = scalar_select %p24, %s26, %s17
    %p28 = scmp.ge.s32.totalorder %s27, 2
    %s29 = scalar_select %p28, 0, %s27
    %s30 = ssub.s32 %s17, %s29
    %s31 = ssub.s32 %s18, %s25
    %s32 = sor.u32 %s30, %s31
    %p33 = scmp.eq.s32.totalorder %s32, 0
    %s35 = sadd.s32 %s34, 1
    %s36 = scalar_select %p33, %s34, %s35
    %p39 = pneg %p33
    %p40 = scmp.eq.s32.totalorder %s10, 3
    %p41 = por %p39, %p40
    %p42 = scmp.ne.s32.totalorder %s34, %s37
    %p43 = scmp.eq.s32.totalorder %s10, 0
    %p44 = por %p42, %p43
    %p45 = scmp.ne.s32.totalorder %s34, %s37
    %p46 = scmp.eq.s32.totalorder %s15, 3
    %p47 = por %p45, %p46
    %p48 = scmp.ne.s32.totalorder %s37, %s38
    %p49 = scmp.eq.s32.totalorder %s15, 0
    %p50 = por %p48, %p49
    %p51 = scmp.ne.s32.totalorder %s37, %s38
    %p52 = scmp.eq.s32.totalorder %s16, 3
    %p53 = por %p51, %p52
    %p55 = scmp.ne.s32.totalorder %s38, %s54
    %p56 = scmp.eq.s32.totalorder %s16, 0
    %p57 = por %p55, %p56
    %s58 = smul.u32 %s18, 8
    %s59 = ssub.s32 %s58, 1
    %p60 = scmp.gt.s32.totalorder %s59, 0
    %s61 = scalar_select %p60, %s59, 0
    %s62 = smul.u32 %s25, 8
    %s63 = ssub.s32 %s62, 1
    %p64 = scmp.gt.s32.totalorder %s63, 0
    %s65 = scalar_select %p64, %s63, 0
    %s66 = ssub.s32 %s17, %s29
    %s67 = ssub.s32 %s61, %s65
    %s68 = sor.u32 %s66, %s67
    %p69 = scmp.eq.s32.totalorder %s68, 0
    %s71 = sadd.s32 %s70, 1
    %s72 = scalar_select %p69, %s70, %s71
    %p75 = pneg %p69
    %p76 = scmp.eq.s32.totalorder %s10, 3
    %p77 = por %p75, %p76
    %p78 = scmp.ne.s32.totalorder %s70, %s73
    %p79 = scmp.eq.s32.totalorder %s10, 0
    %p80 = por %p78, %p79
    %p81 = scmp.ne.s32.totalorder %s70, %s73
    %p82 = scmp.eq.s32.totalorder %s15, 3
    %p83 = por %p81, %p82
    %p84 = scmp.ne.s32.totalorder %s73, %s74
    %p85 = scmp.eq.s32.totalorder %s15, 0
    %p86 = por %p84, %p85
    %p87 = scmp.ne.s32.totalorder %s73, %s74
    %p88 = scmp.eq.s32.totalorder %s16, 3
    %p89 = por %p87, %p88
    %p91 = scmp.ne.s32.totalorder %s74, %s90
    %p92 = scmp.eq.s32.totalorder %s16, 0
    %p93 = por %p91, %p92
    %s94 = sadd.s32 %s18, 1
    %s95 = smul.u32 %s94, 8
    %p96 = scmp.lt.s32.totalorder %s95, 15
    %s97 = scalar_select %p96, %s95, 15
    %s98 = sadd.s32 %s25, 1
    %s99 = smul.u32 %s98, 8
    %p100 = scmp.lt.s32.totalorder %s99, 15
    %s101 = scalar_select %p100, %s99, 15
    %s102 = ssub.s32 %s17, %s29
    %s103 = ssub.s32 %s97, %s101
    %s104 = sor.u32 %s102, %s103
    %p105 = scmp.eq.s32.totalorder %s104, 0
    %s107 = sadd.s32 %s106, 1
    %s108 = scalar_select %p105, %s106, %s107
    %p111 = pneg %p105
    %p112 = scmp.eq.s32.totalorder %s10, 3
    %p113 = por %p111, %p112
    %p114 = scmp.ne.s32.totalorder %s106, %s109
    %p115 = scmp.eq.s32.totalorder %s10, 0
    %p116 = por %p114, %p115
    %p117 = scmp.ne.s32.totalorder %s106, %s109
    %p118 = scmp.eq.s32.totalorder %s15, 3
    %p119 = por %p117, %p118
    %p120 = scmp.ne.s32.totalorder %s109, %s110
    %p121 = scmp.eq.s32.totalorder %s15, 0
    %p122 = por %p120, %p121
    %p123 = scmp.ne.s32.totalorder %s109, %s110
    %p124 = scmp.eq.s32.totalorder %s16, 3
    %p125 = por %p123, %p124
    %p127 = scmp.ne.s32.totalorder %s110, %s126
    %p128 = scmp.eq.s32.totalorder %s16, 0
    %p129 = por %p127, %p128
    %s131 = sadd.s32 %s130, 1
    %p134 = scmp.eq.s32.totalorder %s10, 3
    %p135 = scmp.ne.s32.totalorder %s130, %s132
    %p136 = scmp.eq.s32.totalorder %s10, 0
    %p137 = por %p135, %p136
    %p138 = scmp.ne.s32.totalorder %s130, %s132
    %p139 = scmp.eq.s32.totalorder %s15, 3
    %p140 = por %p138, %p139
    %p141 = scmp.ne.s32.totalorder %s132, %s133
    %p142 = scmp.eq.s32.totalorder %s15, 0
    %p143 = por %p141, %p142
    %p144 = scmp.ne.s32.totalorder %s132, %s133
    %p145 = scmp.eq.s32.totalorder %s16, 3
    %p146 = por %p144, %p145
    %p148 = scmp.ne.s32.totalorder %s133, %s147
    %p149 = scmp.eq.s32.totalorder %s16, 0
    %p150 = por %p148, %p149
    %s151 = ssub.s32 %s17, %s29
    %s152 = ssub.s32 %s18, %s25
    %s153 = sor.u32 %s151, %s152
    %p154 = scmp.eq.s32.totalorder %s153, 0
    %s156 = sadd.s32 %s155, 1
    %s157 = scalar_select %p154, %s155, %s156
    %p160 = pneg %p154
    %p161 = scmp.eq.s32.totalorder %s10, 3
    %p162 = por %p160, %p161
    %p163 = scmp.ne.s32.totalorder %s155, %s158
    %p164 = scmp.eq.s32.totalorder %s10, 0
    %p165 = por %p163, %p164
    %p166 = scmp.ne.s32.totalorder %s155, %s158
    %p167 = scmp.eq.s32.totalorder %s15, 3
    %p168 = por %p166, %p167
    %p169 = scmp.ne.s32.totalorder %s158, %s159
    %p170 = scmp.eq.s32.totalorder %s15, 0
    %p171 = por %p169, %p170
    %p172 = scmp.ne.s32.totalorder %s158, %s159
    %p173 = scmp.eq.s32.totalorder %s16, 3
    %p174 = por %p172, %p173
    %p176 = scmp.ne.s32.totalorder %s159, %s175
    %p177 = scmp.eq.s32.totalorder %s16, 0
    %p178 = por %p176, %p177
    %p179 = scmp.le.s32.totalorder 1, %s10
    %p180 = scmp.lt.s32.totalorder %s10, 5
    %p181 = pnand %p179, %p180
    %p182 = pneg %p181
    // Predicated region
    $region9: #{tpu_custom_call.1} parent=5 // pred_check
      _
    $region10: #{tpu_custom_call.1} parent=5 // pred_check_branch
      %184 = sbr.rel (%p181) target = $region12
    $region11: #{tpu_custom_call.1} parent=5 // pred_region
      %s185 = ssub.s32 %s10, 1
      // Predicated region
      $region13: #{tpu_custom_call.1} parent=11 // pred_check
        %p186 = pneg %p143
      $region14: #{tpu_custom_call.1} parent=11 // pred_check_branch
        %188 = sbr.rel (%p186) target = $region16
      $region15: #{tpu_custom_call.1} parent=11 // pred_region
        _
      $region16: #{tpu_custom_call.1} parent=11 // pred_fallthru
        _
    $region12: #{tpu_custom_call.1} parent=5 // pred_fallthru
      _
    %p189 = scmp.lt.s32.totalorder %s10, 4
    // Predicated region
    $region17: #{tpu_custom_call.1} parent=5 // pred_check
      %p190 = pneg %p189
    $region18: #{tpu_custom_call.1} parent=5 // pred_check_branch
      %192 = sbr.rel (%p190) target = $region20
    $region19: #{tpu_custom_call.1} parent=5 // pred_region
      // Predicated region
      $region21: #{tpu_custom_call.1} parent=19 // pred_check
        %p193 = pneg %p44
      $region22: #{tpu_custom_call.1} parent=19 // pred_check_branch
        %195 = sbr.rel (%p193) target = $region24
      $region23: #{tpu_custom_call.1} parent=19 // pred_region
        %s196 = smul.u32 8, %s18
        %p197 = scmp.lt.s32.totalorder %s17, 1
        %s198 = scalar_select %p197, %s17, 1
        %p199 = scmp.lt.s32.totalorder %s196, 15
        %s200 = scalar_select %p199, %s196, 15
        %s201 = smul.addr %s200, 2
        %s202 = smul.addr %s198, 32
        %s203 = sadd.s32 %s201, %s202
        %s204 = smul.addr %s203, 8
        %s205 = scalar_lea.vmem %s0, %s204
        %s206 = smul.u32 8, %s18
      $region24: #{tpu_custom_call.1} parent=19 // pred_fallthru
        _
      // Predicated region
      $region25: #{tpu_custom_call.1} parent=19 // pred_check
        %p207 = pneg %p80
      $region26: #{tpu_custom_call.1} parent=19 // pred_check_branch
        %209 = sbr.rel (%p207) target = $region28
      $region27: #{tpu_custom_call.1} parent=19 // pred_region
        %s210 = smul.u32 %s18, 8
        %s211 = ssub.s32 %s210, 1
        %p212 = scmp.gt.s32.totalorder %s211, 0
        %s213 = scalar_select %p212, %s211, 0
        %p214 = scmp.lt.s32.totalorder %s17, 1
        %s215 = scalar_select %p214, %s17, 1
        %p216 = scmp.lt.s32.totalorder %s213, 15
        %s217 = scalar_select %p216, %s213, 15
        %s218 = smul.addr %s217, 2
        %s219 = smul.addr %s215, 32
        %s220 = sadd.s32 %s218, %s219
        %s221 = smul.addr %s220, 8
        %s222 = scalar_lea.vmem %s1, %s221
        %s223 = smul.u32 %s18, 8
        %s224 = ssub.s32 %s223, 1
        %p225 = scmp.gt.s32.totalorder %s224, 0
        %s226 = scalar_select %p225, %s224, 0
      $region28: #{tpu_custom_call.1} parent=19 // pred_fallthru
        _
      // Predicated region
      $region29: #{tpu_custom_call.1} parent=19 // pred_check
        %p227 = pneg %p116
      $region30: #{tpu_custom_call.1} parent=19 // pred_check_branch
        %229 = sbr.rel (%p227) target = $region32
      $region31: #{tpu_custom_call.1} parent=19 // pred_region
        %s230 = sadd.s32 %s18, 1
        %s231 = smul.u32 %s230, 8
        %p232 = scmp.lt.s32.totalorder %s231, 15
        %s233 = scalar_select %p232, %s231, 15
        %p234 = scmp.lt.s32.totalorder %s17, 1
        %s235 = scalar_select %p234, %s17, 1
        %p236 = scmp.lt.s32.totalorder %s233, 15
        %s237 = scalar_select %p236, %s233, 15
        %s238 = smul.addr %s237, 2
        %s239 = smul.addr %s235, 32
        %s240 = sadd.s32 %s238, %s239
        %s241 = smul.addr %s240, 8
        %s242 = scalar_lea.vmem %s2, %s241
        %s243 = sadd.s32 %s18, 1
        %s244 = smul.u32 %s243, 8
        %p245 = scmp.lt.s32.totalorder %s244, 15
        %s246 = scalar_select %p245, %s244, 15
      $region32: #{tpu_custom_call.1} parent=19 // pred_fallthru
        _
    $region20: #{tpu_custom_call.1} parent=5 // pred_fallthru
      _
    %p247 = scmp.le.s32.totalorder 1, %s10
    %p248 = scmp.lt.s32.totalorder %s10, 5
    %p249 = pnand %p247, %p248
    %p250 = pneg %p249
    // Predicated region
    $region33: #{tpu_custom_call.1} parent=5 // pred_check
      _
    $region34: #{tpu_custom_call.1} parent=5 // pred_check_branch
      %252 = sbr.rel (%p249) target = $region36
    $region35: #{tpu_custom_call.1} parent=5 // pred_region
      %s253 = ssub.s32 %s10, 1
      %s254 = smul.u32 8, %s20
      %p255 = scmp.lt.s32.totalorder %s19, 1
      %s256 = scalar_select %p255, %s19, 1
      %p257 = scmp.lt.s32.totalorder %s254, 15
      %s258 = scalar_select %p257, %s254, 15
      %s259 = smul.addr %s258, 2
      %s260 = smul.addr %s256, 32
      %s261 = sadd.s32 %s259, %s260
      %s262 = smul.addr %s261, 8
      %s263 = scalar_lea.vmem %s0, %s262
      %p264 = pneg %p50
      %p265 = pneg %p47
      %s266 = smul.u32 %s20, 8
      %s267 = ssub.s32 %s266, 1
      %p268 = scmp.gt.s32.totalorder %s267, 0
      %s269 = scalar_select %p268, %s267, 0
      %p270 = scmp.lt.s32.totalorder %s19, 1
      %s271 = scalar_select %p270, %s19, 1
      %p272 = scmp.lt.s32.totalorder %s269, 15
      %s273 = scalar_select %p272, %s269, 15
      %s274 = smul.addr %s273, 2
      %s275 = smul.addr %s271, 32
      %s276 = sadd.s32 %s274, %s275
      %s277 = smul.addr %s276, 8
      %s278 = scalar_lea.vmem %s1, %s277
      %p279 = pneg %p86
      %p280 = pneg %p83
      %s281 = sadd.s32 %s20, 1
      %s282 = smul.u32 %s281, 8
      %p283 = scmp.lt.s32.totalorder %s282, 15
      %s284 = scalar_select %p283, %s282, 15
      %p285 = scmp.lt.s32.totalorder %s19, 1
      %s286 = scalar_select %p285, %s19, 1
      %p287 = scmp.lt.s32.totalorder %s284, 15
      %s288 = scalar_select %p287, %s284, 15
      %s289 = smul.addr %s288, 2
      %s290 = smul.addr %s286, 32
      %s291 = sadd.s32 %s289, %s290
      %s292 = smul.addr %s291, 8
      %s293 = scalar_lea.vmem %s2, %s292
      %p294 = pneg %p122
      %p295 = pneg %p119
      %p296 = pneg %p143
      %p297 = pneg %p140
      %p298 = pneg %p171
      %p299 = pneg %p168
      %s300 = smul.u32 8, %s20
      %p301 = scmp.lt.s32.totalorder %s19, 1
      %s302 = scalar_select %p301, %s19, 1
      %p303 = scmp.lt.s32.totalorder %s300, 15
      %s304 = scalar_select %p303, %s300, 15
      %s305 = smul.addr %s304, 2
      %s306 = smul.addr %s302, 32
      %s307 = sadd.s32 %s305, %s306
      %s308 = smul.addr %s307, 8
      %s309 = scalar_lea.vmem %s4, %s308
      %s310 = smul.u32 8, %s20
      %p311 = scmp.lt.s32.totalorder %s19, 1
      %s312 = scalar_select %p311, %s19, 1
      %p313 = scmp.lt.s32.totalorder %s310, 15
      %s314 = scalar_select %p313, %s310, 15
      %s315 = smul.addr %s314, 2
      %s316 = smul.addr %s312, 32
      %s317 = sadd.s32 %s315, %s316
      %s318 = smul.addr %s317, 8
      %s319 = scalar_lea.vmem %s0, %s318
      %s320 = smul.u32 8, %s20
      %s321 = smul.u32 %s20, 8
      %s322 = ssub.s32 %s321, 1
      %p323 = scmp.gt.s32.totalorder %s322, 0
      %s324 = scalar_select %p323, %s322, 0
      %p325 = scmp.lt.s32.totalorder %s19, 1
      %s326 = scalar_select %p325, %s19, 1
      %p327 = scmp.lt.s32.totalorder %s324, 15
      %s328 = scalar_select %p327, %s324, 15
      %s329 = smul.addr %s328, 2
      %s330 = smul.addr %s326, 32
      %s331 = sadd.s32 %s329, %s330
      %s332 = smul.addr %s331, 8
      %s333 = scalar_lea.vmem %s1, %s332
      %s334 = smul.u32 %s20, 8
      %s335 = ssub.s32 %s334, 1
      %p336 = scmp.gt.s32.totalorder %s335, 0
      %s337 = scalar_select %p336, %s335, 0
      %s338 = sadd.s32 %s20, 1
      %s339 = smul.u32 %s338, 8
      %p340 = scmp.lt.s32.totalorder %s339, 15
      %s341 = scalar_select %p340, %s339, 15
      %p342 = scmp.lt.s32.totalorder %s19, 1
      %s343 = scalar_select %p342, %s19, 1
      %p344 = scmp.lt.s32.totalorder %s341, 15
      %s345 = scalar_select %p344, %s341, 15
      %s346 = smul.addr %s345, 2
      %s347 = smul.addr %s343, 32
      %s348 = sadd.s32 %s346, %s347
      %s349 = smul.addr %s348, 8
      %s350 = scalar_lea.vmem %s2, %s349
      %s351 = sadd.s32 %s20, 1
      %s352 = smul.u32 %s351, 8
      %p353 = scmp.lt.s32.totalorder %s352, 15
      %s354 = scalar_select %p353, %s352, 15
      %s355 = smul.u32 8, %s20
      %p356 = scmp.lt.s32.totalorder %s19, 1
      %s357 = scalar_select %p356, %s19, 1
      %p358 = scmp.lt.s32.totalorder %s355, 15
      %s359 = scalar_select %p358, %s355, 15
      %s360 = smul.addr %s359, 2
      %s361 = smul.addr %s357, 32
      %s362 = sadd.s32 %s360, %s361
      %s363 = smul.addr %s362, 8
      %s364 = scalar_lea.vmem %s4, %s363
      %s365 = smul.u32 8, %s20
      %v366 = vld [vmem:[%s319] sm:$0xff]
      %v367 = vld [vmem:[%s319 + $0x8] sm:$0xff]
      %v368 = vld [vmem:[%s319 + $0x10] sm:$0xff]
      %v369 = vld [vmem:[%s319 + $0x18] sm:$0xff]
      %v370 = vld [vmem:[%s319 + $0x20] sm:$0xff]
      %v371 = vld [vmem:[%s319 + $0x28] sm:$0xff]
      %v372 = vld [vmem:[%s319 + $0x30] sm:$0xff]
      %v373 = vld [vmem:[%s319 + $0x38] sm:$0xff]
      %v374 = vld [vmem:[%s319 + $0x40] sm:$0xff]
      %v375 = vld [vmem:[%s319 + $0x48] sm:$0xff]
      %v376 = vld [vmem:[%s319 + $0x50] sm:$0xff]
      %v377 = vld [vmem:[%s319 + $0x58] sm:$0xff]
      %v378 = vld [vmem:[%s319 + $0x60] sm:$0xff]
      %v379 = vld [vmem:[%s319 + $0x68] sm:$0xff]
      %v380 = vld [vmem:[%s319 + $0x70] sm:$0xff]
      %v381 = vld [vmem:[%s319 + $0x78] sm:$0xff]
      %s382 = scalar_lea.vmem [#allocation2], 24
      %vm383 = vcmask 31744
      %384 = vst.msk [vmem:[%s382 + $0x1] sm:$0xff] %vm383, %v366
      %385 = vst.msk [vmem:[%s382 + $0x9] sm:$0xff] %vm383, %v367
      %386 = vst.msk [vmem:[%s382 + $0x19] sm:$0xff] %vm383, %v368
      %387 = vst.msk [vmem:[%s382 + $0x21] sm:$0xff] %vm383, %v369
      %388 = vst.msk [vmem:[%s382 + $0x31] sm:$0xff] %vm383, %v370
      %389 = vst.msk [vmem:[%s382 + $0x39] sm:$0xff] %vm383, %v371
      %390 = vst.msk [vmem:[%s382 + $0x49] sm:$0xff] %vm383, %v372
      %391 = vst.msk [vmem:[%s382 + $0x51] sm:$0xff] %vm383, %v373
      %392 = vst.msk [vmem:[%s382 + $0x61] sm:$0xff] %vm383, %v374
      %393 = vst.msk [vmem:[%s382 + $0x69] sm:$0xff] %vm383, %v375
      %394 = vst.msk [vmem:[%s382 + $0x79] sm:$0xff] %vm383, %v376
      %395 = vst.msk [vmem:[%s382 + $0x81] sm:$0xff] %vm383, %v377
      %396 = vst.msk [vmem:[%s382 + $0x91] sm:$0xff] %vm383, %v378
      %397 = vst.msk [vmem:[%s382 + $0x99] sm:$0xff] %vm383, %v379
      %398 = vst.msk [vmem:[%s382 + $0xa9] sm:$0xff] %vm383, %v380
      %399 = vst.msk [vmem:[%s382 + $0xb1] sm:$0xff] %vm383, %v381
      %vm400 = vcmask 24576
      %401 = vst.msk [vmem:[#allocation2] sm:$0x1] %vm400, 0.0
      %402 = vst.msk [vmem:[#allocation2 + $0x18] sm:$0x1] %vm400, 0.0
      %403 = vst.msk [vmem:[#allocation2 + $0x30] sm:$0x1] %vm400, 0.0
      %404 = vst.msk [vmem:[#allocation2 + $0x48] sm:$0x1] %vm400, 0.0
      %405 = vst.msk [vmem:[#allocation2 + $0x60] sm:$0x1] %vm400, 0.0
      %406 = vst.msk [vmem:[#allocation2 + $0x78] sm:$0x1] %vm400, 0.0
      %407 = vst.msk [vmem:[#allocation2 + $0x90] sm:$0x1] %vm400, 0.0
      %408 = vst.msk [vmem:[#allocation2 + $0xa8] sm:$0x1] %vm400, 0.0
      %409 = vst.msk [vmem:[#allocation2 + $0xc0] sm:$0x1] %vm400, 0.0
      %410 = vst.msk [vmem:[#allocation2 + $0xd8] sm:$0x1] %vm400, 0.0
      %411 = vst.msk [vmem:[#allocation2 + $0x11] sm:$0x1] %vm400, 0.0
      %412 = vst.msk [vmem:[#allocation2 + $0x29] sm:$0x1] %vm400, 0.0
      %413 = vst.msk [vmem:[#allocation2 + $0x41] sm:$0x1] %vm400, 0.0
      %414 = vst.msk [vmem:[#allocation2 + $0x59] sm:$0x1] %vm400, 0.0
      %415 = vst.msk [vmem:[#allocation2 + $0x71] sm:$0x1] %vm400, 0.0
      %416 = vst.msk [vmem:[#allocation2 + $0x89] sm:$0x1] %vm400, 0.0
      %417 = vst.msk [vmem:[#allocation2 + $0xa1] sm:$0x1] %vm400, 0.0
      %418 = vst.msk [vmem:[#allocation2 + $0xb9] sm:$0x1] %vm400, 0.0
      %419 = vst.msk [vmem:[#allocation2 + $0xd1] sm:$0x1] %vm400, 0.0
      %420 = vst.msk [vmem:[#allocation2 + $0xe9] sm:$0x1] %vm400, 0.0
      %p421 = scmp.gt.s32.totalorder %s20, 0
      // Predicated region
      $region37: #{tpu_custom_call.1} parent=35 // pred_check
        %p422 = pneg %p421
      $region38: #{tpu_custom_call.1} parent=35 // pred_check_branch
        %424 = sbr.rel (%p422) target = $region40
      $region39: #{tpu_custom_call.1} parent=35 // pred_region
        %v425 = vld [vmem:[%s333] sm:$0xff]
        %v426 = vld [vmem:[%s333 + $0x8] sm:$0xff]
        %427 = vst.msk [vmem:[#allocation2 + $0x1] sm:$0xff] %vm383, %v425
        %428 = vst.msk [vmem:[#allocation2 + $0x9] sm:$0xff] %vm383, %v426
      $region40: #{tpu_custom_call.1} parent=35 // pred_fallthru
        _
      %p429 = scmp.eq.s32.totalorder %s20, 0
      // Predicated region
      $region41: #{tpu_custom_call.1} parent=35 // pred_check
        %p430 = pneg %p429
      $region42: #{tpu_custom_call.1} parent=35 // pred_check_branch
        %432 = sbr.rel (%p430) target = $region44
      $region43: #{tpu_custom_call.1} parent=35 // pred_region
        %433 = vst.msk [vmem:[#allocation2 + $0x1] sm:$0xff] %vm383, 0.0
        %434 = vst.msk [vmem:[#allocation2 + $0x9] sm:$0xff] %vm383, 0.0
      $region44: #{tpu_custom_call.1} parent=35 // pred_fallthru
        _
      %p435 = scmp.lt.s32.totalorder %s20, 1
      // Predicated region
      $region45: #{tpu_custom_call.1} parent=35 // pred_check
        %p436 = pneg %p435
      $region46: #{tpu_custom_call.1} parent=35 // pred_check_branch
        %438 = sbr.rel (%p436) target = $region48
      $region47: #{tpu_custom_call.1} parent=35 // pred_region
        %v439 = vld [vmem:[%s350] sm:$0xff]
        %v440 = vld [vmem:[%s350 + $0x8] sm:$0xff]
        %s441 = scalar_lea.vmem [#allocation2], 216
        %442 = vst.msk [vmem:[%s441 + $0x1] sm:$0xff] %vm383, %v439
        %443 = vst.msk [vmem:[%s441 + $0x9] sm:$0xff] %vm383, %v440
      $region48: #{tpu_custom_call.1} parent=35 // pred_fallthru
        _
      %p444 = scmp.eq.s32.totalorder %s20, 1
      // Predicated region
      $region49: #{tpu_custom_call.1} parent=35 // pred_check
        %p445 = pneg %p444
      $region50: #{tpu_custom_call.1} parent=35 // pred_check_branch
        %447 = sbr.rel (%p445) target = $region52
      $region51: #{tpu_custom_call.1} parent=35 // pred_region
        %s448 = scalar_lea.vmem [#allocation2], 216
        %449 = vst.msk [vmem:[%s448 + $0x1] sm:$0xff] %vm383, 0.0
        %450 = vst.msk [vmem:[%s448 + $0x9] sm:$0xff] %vm383, 0.0
      $region52: #{tpu_custom_call.1} parent=35 // pred_fallthru
        _
      %v451 = vld [vmem:[#allocation2] sm:$0xff]
      %v452 = vld [vmem:[#allocation2 + $0x8] sm:$0xff]
      %v453 = vld [vmem:[#allocation2 + $0x18] sm:$0xff]
      %v454 = vld [vmem:[#allocation2 + $0x20] sm:$0xff]
      %v455 = vld [vmem:[#allocation2 + $0x30] sm:$0xff]
      %v456 = vld [vmem:[#allocation2 + $0x38] sm:$0xff]
      %v457 = vld [vmem:[#allocation2 + $0x48] sm:$0xff]
      %v458 = vld [vmem:[#allocation2 + $0x50] sm:$0xff]
      %v459 = vld [vmem:[#allocation2 + $0x60] sm:$0xff]
      %v460 = vld [vmem:[#allocation2 + $0x68] sm:$0xff]
      %v461 = vld [vmem:[#allocation2 + $0x78] sm:$0xff]
      %v462 = vld [vmem:[#allocation2 + $0x80] sm:$0xff]
      %v463 = vld [vmem:[#allocation2 + $0x90] sm:$0xff]
      %v464 = vld [vmem:[#allocation2 + $0x98] sm:$0xff]
      %v465 = vld [vmem:[#allocation2 + $0xa8] sm:$0xff]
      %v466 = vld [vmem:[#allocation2 + $0xb0] sm:$0xff]
      %467 = vst.msk [vmem:[#allocation3] sm:$0xff] %vm383, %v451
      %468 = vst.msk [vmem:[#allocation3 + $0x8] sm:$0xff] %vm383, %v452
      %469 = vst.msk [vmem:[#allocation3 + $0x10] sm:$0xff] %vm383, %v453
      %470 = vst.msk [vmem:[#allocation3 + $0x18] sm:$0xff] %vm383, %v454
      %471 = vst.msk [vmem:[#allocation3 + $0x20] sm:$0xff] %vm383, %v455
      %472 = vst.msk [vmem:[#allocation3 + $0x28] sm:$0xff] %vm383, %v456
      %473 = vst.msk [vmem:[#allocation3 + $0x30] sm:$0xff] %vm383, %v457
      %474 = vst.msk [vmem:[#allocation3 + $0x38] sm:$0xff] %vm383, %v458
      %475 = vst.msk [vmem:[#allocation3 + $0x40] sm:$0xff] %vm383, %v459
      %476 = vst.msk [vmem:[#allocation3 + $0x48] sm:$0xff] %vm383, %v460
      %477 = vst.msk [vmem:[#allocation3 + $0x50] sm:$0xff] %vm383, %v461
      %478 = vst.msk [vmem:[#allocation3 + $0x58] sm:$0xff] %vm383, %v462
      %479 = vst.msk [vmem:[#allocation3 + $0x60] sm:$0xff] %vm383, %v463
      %480 = vst.msk [vmem:[#allocation3 + $0x68] sm:$0xff] %vm383, %v464
      %481 = vst.msk [vmem:[#allocation3 + $0x70] sm:$0xff] %vm383, %v465
      %482 = vst.msk [vmem:[#allocation3 + $0x78] sm:$0xff] %vm383, %v466
      %v483 = vld [vmem:[#allocation2 + $0x1] sm:$0xff]
      %v484 = vld [vmem:[#allocation2 + $0x9] sm:$0xff]
      %v485 = vld [vmem:[#allocation2 + $0x19] sm:$0xff]
      %v486 = vld [vmem:[#allocation2 + $0x21] sm:$0xff]
      %v487 = vld [vmem:[#allocation2 + $0x31] sm:$0xff]
      %v488 = vld [vmem:[#allocation2 + $0x39] sm:$0xff]
      %v489 = vld [vmem:[#allocation2 + $0x49] sm:$0xff]
      %v490 = vld [vmem:[#allocation2 + $0x51] sm:$0xff]
      %v491 = vld [vmem:[#allocation2 + $0x61] sm:$0xff]
      %v492 = vld [vmem:[#allocation2 + $0x69] sm:$0xff]
      %v493 = vld [vmem:[#allocation2 + $0x79] sm:$0xff]
      %v494 = vld [vmem:[#allocation2 + $0x81] sm:$0xff]
      %v495 = vld [vmem:[#allocation2 + $0x91] sm:$0xff]
      %v496 = vld [vmem:[#allocation2 + $0x99] sm:$0xff]
      %v497 = vld [vmem:[#allocation2 + $0xa9] sm:$0xff]
      %v498 = vld [vmem:[#allocation2 + $0xb1] sm:$0xff]
      %515 = vrot.lane.b32.xlu0 %v483, 4
      %v516 = vpop.permute.xlu0 %515
      %517 = vrot.lane.b32.xlu0 %v484, 4
      %v518 = vpop.permute.xlu0 %517
      %519 = vrot.lane.b32.xlu0 %v485, 4
      %v520 = vpop.permute.xlu0 %519
      %521 = vrot.lane.b32.xlu0 %v486, 4
      %v522 = vpop.permute.xlu0 %521
      %523 = vrot.lane.b32.xlu0 %v487, 4
      %v524 = vpop.permute.xlu0 %523
      %525 = vrot.lane.b32.xlu0 %v488, 4
      %v526 = vpop.permute.xlu0 %525
      %527 = vrot.lane.b32.xlu0 %v489, 4
      %v528 = vpop.permute.xlu0 %527
      %529 = vrot.lane.b32.xlu0 %v490, 4
      %v530 = vpop.permute.xlu0 %529
      %531 = vrot.lane.b32.xlu0 %v491, 4
      %v532 = vpop.permute.xlu0 %531
      %533 = vrot.lane.b32.xlu0 %v492, 4
      %v534 = vpop.permute.xlu0 %533
      %535 = vrot.lane.b32.xlu0 %v493, 4
      %v536 = vpop.permute.xlu0 %535
      %537 = vrot.lane.b32.xlu0 %v494, 4
      %v538 = vpop.permute.xlu0 %537
      %539 = vrot.lane.b32.xlu0 %v495, 4
      %v540 = vpop.permute.xlu0 %539
      %541 = vrot.lane.b32.xlu0 %v496, 4
      %v542 = vpop.permute.xlu0 %541
      %543 = vrot.lane.b32.xlu0 %v497, 4
      %v544 = vpop.permute.xlu0 %543
      %545 = vrot.lane.b32.xlu0 %v498, 4
      %v546 = vpop.permute.xlu0 %545
      %vm563 = vcmask 64544
      %564 = vst.msk [vmem:[#allocation3] sm:$0xff] %vm563, %v516
      %565 = vst.msk [vmem:[#allocation3 + $0x8] sm:$0xff] %vm563, %v518
      %566 = vst.msk [vmem:[#allocation3 + $0x10] sm:$0xff] %vm563, %v520
      %567 = vst.msk [vmem:[#allocation3 + $0x18] sm:$0xff] %vm563, %v522
      %568 = vst.msk [vmem:[#allocation3 + $0x20] sm:$0xff] %vm563, %v524
      %569 = vst.msk [vmem:[#allocation3 + $0x28] sm:$0xff] %vm563, %v526
      %570 = vst.msk [vmem:[#allocation3 + $0x30] sm:$0xff] %vm563, %v528
      %571 = vst.msk [vmem:[#allocation3 + $0x38] sm:$0xff] %vm563, %v530
      %572 = vst.msk [vmem:[#allocation3 + $0x40] sm:$0xff] %vm563, %v532
      %573 = vst.msk [vmem:[#allocation3 + $0x48] sm:$0xff] %vm563, %v534
      %574 = vst.msk [vmem:[#allocation3 + $0x50] sm:$0xff] %vm563, %v536
      %575 = vst.msk [vmem:[#allocation3 + $0x58] sm:$0xff] %vm563, %v538
      %576 = vst.msk [vmem:[#allocation3 + $0x60] sm:$0xff] %vm563, %v540
      %577 = vst.msk [vmem:[#allocation3 + $0x68] sm:$0xff] %vm563, %v542
      %578 = vst.msk [vmem:[#allocation3 + $0x70] sm:$0xff] %vm563, %v544
      %579 = vst.msk [vmem:[#allocation3 + $0x78] sm:$0xff] %vm563, %v546
      %v580 = vld [vmem:[#allocation2 + $0x2] sm:$0xff]
      %v581 = vld [vmem:[#allocation2 + $0xa] sm:$0xff]
      %v582 = vld [vmem:[#allocation2 + $0x1a] sm:$0xff]
      %v583 = vld [vmem:[#allocation2 + $0x22] sm:$0xff]
      %v584 = vld [vmem:[#allocation2 + $0x32] sm:$0xff]
      %v585 = vld [vmem:[#allocation2 + $0x3a] sm:$0xff]
      %v586 = vld [vmem:[#allocation2 + $0x4a] sm:$0xff]
      %v587 = vld [vmem:[#allocation2 + $0x52] sm:$0xff]
      %v588 = vld [vmem:[#allocation2 + $0x62] sm:$0xff]
      %v589 = vld [vmem:[#allocation2 + $0x6a] sm:$0xff]
      %v590 = vld [vmem:[#allocation2 + $0x7a] sm:$0xff]
      %v591 = vld [vmem:[#allocation2 + $0x82] sm:$0xff]
      %v592 = vld [vmem:[#allocation2 + $0x92] sm:$0xff]
      %v593 = vld [vmem:[#allocation2 + $0x9a] sm:$0xff]
      %v594 = vld [vmem:[#allocation2 + $0xaa] sm:$0xff]
      %v595 = vld [vmem:[#allocation2 + $0xb2] sm:$0xff]
      %612 = vrot.lane.b32.xlu0 %v580, 8
      %v613 = vpop.permute.xlu0 %612
      %614 = vrot.lane.b32.xlu0 %v581, 8
      %v615 = vpop.permute.xlu0 %614
      %616 = vrot.lane.b32.xlu0 %v582, 8
      %v617 = vpop.permute.xlu0 %616
      %618 = vrot.lane.b32.xlu0 %v583, 8
      %v619 = vpop.permute.xlu0 %618
      %620 = vrot.lane.b32.xlu0 %v584, 8
      %v621 = vpop.permute.xlu0 %620
      %622 = vrot.lane.b32.xlu0 %v585, 8
      %v623 = vpop.permute.xlu0 %622
      %624 = vrot.lane.b32.xlu0 %v586, 8
      %v625 = vpop.permute.xlu0 %624
      %626 = vrot.lane.b32.xlu0 %v587, 8
      %v627 = vpop.permute.xlu0 %626
      %628 = vrot.lane.b32.xlu0 %v588, 8
      %v629 = vpop.permute.xlu0 %628
      %630 = vrot.lane.b32.xlu0 %v589, 8
      %v631 = vpop.permute.xlu0 %630
      %632 = vrot.lane.b32.xlu0 %v590, 8
      %v633 = vpop.permute.xlu0 %632
      %634 = vrot.lane.b32.xlu0 %v591, 8
      %v635 = vpop.permute.xlu0 %634
      %636 = vrot.lane.b32.xlu0 %v592, 8
      %v637 = vpop.permute.xlu0 %636
      %638 = vrot.lane.b32.xlu0 %v593, 8
      %v639 = vpop.permute.xlu0 %638
      %640 = vrot.lane.b32.xlu0 %v594, 8
      %v641 = vpop.permute.xlu0 %640
      %642 = vrot.lane.b32.xlu0 %v595, 8
      %v643 = vpop.permute.xlu0 %642
      %vm660 = vcmask 97344
      %661 = vst.msk [vmem:[#allocation3] sm:$0xff] %vm660, %v613
      %662 = vst.msk [vmem:[#allocation3 + $0x8] sm:$0xff] %vm660, %v615
      %663 = vst.msk [vmem:[#allocation3 + $0x10] sm:$0xff] %vm660, %v617
      %664 = vst.msk [vmem:[#allocation3 + $0x18] sm:$0xff] %vm660, %v619
      %665 = vst.msk [vmem:[#allocation3 + $0x20] sm:$0xff] %vm660, %v621
      %666 = vst.msk [vmem:[#allocation3 + $0x28] sm:$0xff] %vm660, %v623
      %667 = vst.msk [vmem:[#allocation3 + $0x30] sm:$0xff] %vm660, %v625
      %668 = vst.msk [vmem:[#allocation3 + $0x38] sm:$0xff] %vm660, %v627
      %669 = vst.msk [vmem:[#allocation3 + $0x40] sm:$0xff] %vm660, %v629
      %670 = vst.msk [vmem:[#allocation3 + $0x48] sm:$0xff] %vm660, %v631
      %671 = vst.msk [vmem:[#allocation3 + $0x50] sm:$0xff] %vm660, %v633
      %672 = vst.msk [vmem:[#allocation3 + $0x58] sm:$0xff] %vm660, %v635
      %673 = vst.msk [vmem:[#allocation3 + $0x60] sm:$0xff] %vm660, %v637
      %674 = vst.msk [vmem:[#allocation3 + $0x68] sm:$0xff] %vm660, %v639
      %675 = vst.msk [vmem:[#allocation3 + $0x70] sm:$0xff] %vm660, %v641
      %676 = vst.msk [vmem:[#allocation3 + $0x78] sm:$0xff] %vm660, %v643
      %v677 = vld [vmem:[%s382] sm:$0xff]
      %v678 = vld [vmem:[%s382 + $0x8] sm:$0xff]
      %v679 = vld [vmem:[%s382 + $0x18] sm:$0xff]
      %v680 = vld [vmem:[%s382 + $0x20] sm:$0xff]
      %v681 = vld [vmem:[%s382 + $0x30] sm:$0xff]
      %v682 = vld [vmem:[%s382 + $0x38] sm:$0xff]
      %v683 = vld [vmem:[%s382 + $0x48] sm:$0xff]
      %v684 = vld [vmem:[%s382 + $0x50] sm:$0xff]
      %v685 = vld [vmem:[%s382 + $0x60] sm:$0xff]
      %v686 = vld [vmem:[%s382 + $0x68] sm:$0xff]
      %v687 = vld [vmem:[%s382 + $0x78] sm:$0xff]
      %v688 = vld [vmem:[%s382 + $0x80] sm:$0xff]
      %v689 = vld [vmem:[%s382 + $0x90] sm:$0xff]
      %v690 = vld [vmem:[%s382 + $0x98] sm:$0xff]
      %v691 = vld [vmem:[%s382 + $0xa8] sm:$0xff]
      %v692 = vld [vmem:[%s382 + $0xb0] sm:$0xff]
      %709 = vrot.lane.b32.xlu0 %v677, 12
      %v710 = vpop.permute.xlu0 %709
      %711 = vrot.lane.b32.xlu0 %v678, 12
      %v712 = vpop.permute.xlu0 %711
      %713 = vrot.lane.b32.xlu0 %v679, 12
      %v714 = vpop.permute.xlu0 %713
      %715 = vrot.lane.b32.xlu0 %v680, 12
      %v716 = vpop.permute.xlu0 %715
      %717 = vrot.lane.b32.xlu0 %v681, 12
      %v718 = vpop.permute.xlu0 %717
      %719 = vrot.lane.b32.xlu0 %v682, 12
      %v720 = vpop.permute.xlu0 %719
      %721 = vrot.lane.b32.xlu0 %v683, 12
      %v722 = vpop.permute.xlu0 %721
      %723 = vrot.lane.b32.xlu0 %v684, 12
      %v724 = vpop.permute.xlu0 %723
      %725 = vrot.lane.b32.xlu0 %v685, 12
      %v726 = vpop.permute.xlu0 %725
      %727 = vrot.lane.b32.xlu0 %v686, 12
      %v728 = vpop.permute.xlu0 %727
      %729 = vrot.lane.b32.xlu0 %v687, 12
      %v730 = vpop.permute.xlu0 %729
      %731 = vrot.lane.b32.xlu0 %v688, 12
      %v732 = vpop.permute.xlu0 %731
      %733 = vrot.lane.b32.xlu0 %v689, 12
      %v734 = vpop.permute.xlu0 %733
      %735 = vrot.lane.b32.xlu0 %v690, 12
      %v736 = vpop.permute.xlu0 %735
      %737 = vrot.lane.b32.xlu0 %v691, 12
      %v738 = vpop.permute.xlu0 %737
      %739 = vrot.lane.b32.xlu0 %v692, 12
      %v740 = vpop.permute.xlu0 %739
      %vm757 = vcmask 130144
      %758 = vst.msk [vmem:[#allocation3] sm:$0xff] %vm757, %v710
      %759 = vst.msk [vmem:[#allocation3 + $0x8] sm:$0xff] %vm757, %v712
      %760 = vst.msk [vmem:[#allocation3 + $0x10] sm:$0xff] %vm757, %v714
      %761 = vst.msk [vmem:[#allocation3 + $0x18] sm:$0xff] %vm757, %v716
      %762 = vst.msk [vmem:[#allocation3 + $0x20] sm:$0xff] %vm757, %v718
      %763 = vst.msk [vmem:[#allocation3 + $0x28] sm:$0xff] %vm757, %v720
      %764 = vst.msk [vmem:[#allocation3 + $0x30] sm:$0xff] %vm757, %v722
      %765 = vst.msk [vmem:[#allocation3 + $0x38] sm:$0xff] %vm757, %v724
      %766 = vst.msk [vmem:[#allocation3 + $0x40] sm:$0xff] %vm757, %v726
      %767 = vst.msk [vmem:[#allocation3 + $0x48] sm:$0xff] %vm757, %v728
      %768 = vst.msk [vmem:[#allocation3 + $0x50] sm:$0xff] %vm757, %v730
      %769 = vst.msk [vmem:[#allocation3 + $0x58] sm:$0xff] %vm757, %v732
      %770 = vst.msk [vmem:[#allocation3 + $0x60] sm:$0xff] %vm757, %v734
      %771 = vst.msk [vmem:[#allocation3 + $0x68] sm:$0xff] %vm757, %v736
      %772 = vst.msk [vmem:[#allocation3 + $0x70] sm:$0xff] %vm757, %v738
      %773 = vst.msk [vmem:[#allocation3 + $0x78] sm:$0xff] %vm757, %v740
      %v774 = vld [vmem:[%s382 + $0x1] sm:$0xff]
      %v775 = vld [vmem:[%s382 + $0x9] sm:$0xff]
      %v776 = vld [vmem:[%s382 + $0x19] sm:$0xff]
      %v777 = vld [vmem:[%s382 + $0x21] sm:$0xff]
      %v778 = vld [vmem:[%s382 + $0x31] sm:$0xff]
      %v779 = vld [vmem:[%s382 + $0x39] sm:$0xff]
      %v780 = vld [vmem:[%s382 + $0x49] sm:$0xff]
      %v781 = vld [vmem:[%s382 + $0x51] sm:$0xff]
      %v782 = vld [vmem:[%s382 + $0x61] sm:$0xff]
      %v783 = vld [vmem:[%s382 + $0x69] sm:$0xff]
      %v784 = vld [vmem:[%s382 + $0x79] sm:$0xff]
      %v785 = vld [vmem:[%s382 + $0x81] sm:$0xff]
      %v786 = vld [vmem:[%s382 + $0x91] sm:$0xff]
      %v787 = vld [vmem:[%s382 + $0x99] sm:$0xff]
      %v788 = vld [vmem:[%s382 + $0xa9] sm:$0xff]
      %v789 = vld [vmem:[%s382 + $0xb1] sm:$0xff]
      %806 = vrot.lane.b32.xlu0 %v774, 16
      %v807 = vpop.permute.xlu0 %806
      %808 = vrot.lane.b32.xlu0 %v775, 16
      %v809 = vpop.permute.xlu0 %808
      %810 = vrot.lane.b32.xlu0 %v776, 16
      %v811 = vpop.permute.xlu0 %810
      %812 = vrot.lane.b32.xlu0 %v777, 16
      %v813 = vpop.permute.xlu0 %812
      %814 = vrot.lane.b32.xlu0 %v778, 16
      %v815 = vpop.permute.xlu0 %814
      %816 = vrot.lane.b32.xlu0 %v779, 16
      %v817 = vpop.permute.xlu0 %816
      %818 = vrot.lane.b32.xlu0 %v780, 16
      %v819 = vpop.permute.xlu0 %818
      %820 = vrot.lane.b32.xlu0 %v781, 16
      %v821 = vpop.permute.xlu0 %820
      %822 = vrot.lane.b32.xlu0 %v782, 16
      %v823 = vpop.permute.xlu0 %822
      %824 = vrot.lane.b32.xlu0 %v783, 16
      %v825 = vpop.permute.xlu0 %824
      %826 = vrot.lane.b32.xlu0 %v784, 16
      %v827 = vpop.permute.xlu0 %826
      %828 = vrot.lane.b32.xlu0 %v785, 16
      %v829 = vpop.permute.xlu0 %828
      %830 = vrot.lane.b32.xlu0 %v786, 16
      %v831 = vpop.permute.xlu0 %830
      %832 = vrot.lane.b32.xlu0 %v787, 16
      %v833 = vpop.permute.xlu0 %832
      %834 = vrot.lane.b32.xlu0 %v788, 16
      %v835 = vpop.permute.xlu0 %834
      %836 = vrot.lane.b32.xlu0 %v789, 16
      %v837 = vpop.permute.xlu0 %836
      %vm854 = vcmask 162944
      %855 = vst.msk [vmem:[#allocation3] sm:$0xff] %vm854, %v807
      %856 = vst.msk [vmem:[#allocation3 + $0x8] sm:$0xff] %vm854, %v809
      %857 = vst.msk [vmem:[#allocation3 + $0x10] sm:$0xff] %vm854, %v811
      %858 = vst.msk [vmem:[#allocation3 + $0x18] sm:$0xff] %vm854, %v813
      %859 = vst.msk [vmem:[#allocation3 + $0x20] sm:$0xff] %vm854, %v815
      %860 = vst.msk [vmem:[#allocation3 + $0x28] sm:$0xff] %vm854, %v817
      %861 = vst.msk [vmem:[#allocation3 + $0x30] sm:$0xff] %vm854, %v819
      %862 = vst.msk [vmem:[#allocation3 + $0x38] sm:$0xff] %vm854, %v821
      %863 = vst.msk [vmem:[#allocation3 + $0x40] sm:$0xff] %vm854, %v823
      %864 = vst.msk [vmem:[#allocation3 + $0x48] sm:$0xff] %vm854, %v825
      %865 = vst.msk [vmem:[#allocation3 + $0x50] sm:$0xff] %vm854, %v827
      %866 = vst.msk [vmem:[#allocation3 + $0x58] sm:$0xff] %vm854, %v829
      %867 = vst.msk [vmem:[#allocation3 + $0x60] sm:$0xff] %vm854, %v831
      %868 = vst.msk [vmem:[#allocation3 + $0x68] sm:$0xff] %vm854, %v833
      %869 = vst.msk [vmem:[#allocation3 + $0x70] sm:$0xff] %vm854, %v835
      %870 = vst.msk [vmem:[#allocation3 + $0x78] sm:$0xff] %vm854, %v837
      %v871 = vld [vmem:[%s382 + $0x2] sm:$0xff]
      %v872 = vld [vmem:[%s382 + $0xa] sm:$0xff]
      %v873 = vld [vmem:[%s382 + $0x1a] sm:$0xff]
      %v874 = vld [vmem:[%s382 + $0x22] sm:$0xff]
      %v875 = vld [vmem:[%s382 + $0x32] sm:$0xff]
      %v876 = vld [vmem:[%s382 + $0x3a] sm:$0xff]
      %v877 = vld [vmem:[%s382 + $0x4a] sm:$0xff]
      %v878 = vld [vmem:[%s382 + $0x52] sm:$0xff]
      %v879 = vld [vmem:[%s382 + $0x62] sm:$0xff]
      %v880 = vld [vmem:[%s382 + $0x6a] sm:$0xff]
      %v881 = vld [vmem:[%s382 + $0x7a] sm:$0xff]
      %v882 = vld [vmem:[%s382 + $0x82] sm:$0xff]
      %v883 = vld [vmem:[%s382 + $0x92] sm:$0xff]
      %v884 = vld [vmem:[%s382 + $0x9a] sm:$0xff]
      %v885 = vld [vmem:[%s382 + $0xaa] sm:$0xff]
      %v886 = vld [vmem:[%s382 + $0xb2] sm:$0xff]
      %903 = vrot.lane.b32.xlu0 %v871, 20
      %v904 = vpop.permute.xlu0 %903
      %905 = vrot.lane.b32.xlu0 %v872, 20
      %v906 = vpop.permute.xlu0 %905
      %907 = vrot.lane.b32.xlu0 %v873, 20
      %v908 = vpop.permute.xlu0 %907
      %909 = vrot.lane.b32.xlu0 %v874, 20
      %v910 = vpop.permute.xlu0 %909
      %911 = vrot.lane.b32.xlu0 %v875, 20
      %v912 = vpop.permute.xlu0 %911
      %913 = vrot.lane.b32.xlu0 %v876, 20
      %v914 = vpop.permute.xlu0 %913
      %915 = vrot.lane.b32.xlu0 %v877, 20
      %v916 = vpop.permute.xlu0 %915
      %917 = vrot.lane.b32.xlu0 %v878, 20
      %v918 = vpop.permute.xlu0 %917
      %919 = vrot.lane.b32.xlu0 %v879, 20
      %v920 = vpop.permute.xlu0 %919
      %921 = vrot.lane.b32.xlu0 %v880, 20
      %v922 = vpop.permute.xlu0 %921
      %923 = vrot.lane.b32.xlu0 %v881, 20
      %v924 = vpop.permute.xlu0 %923
      %925 = vrot.lane.b32.xlu0 %v882, 20
      %v926 = vpop.permute.xlu0 %925
      %927 = vrot.lane.b32.xlu0 %v883, 20
      %v928 = vpop.permute.xlu0 %927
      %929 = vrot.lane.b32.xlu0 %v884, 20
      %v930 = vpop.permute.xlu0 %929
      %931 = vrot.lane.b32.xlu0 %v885, 20
      %v932 = vpop.permute.xlu0 %931
      %933 = vrot.lane.b32.xlu0 %v886, 20
      %v934 = vpop.permute.xlu0 %933
      %vm951 = vcmask 195744
      %952 = vst.msk [vmem:[#allocation3] sm:$0xff] %vm951, %v904
      %953 = vst.msk [vmem:[#allocation3 + $0x8] sm:$0xff] %vm951, %v906
      %954 = vst.msk [vmem:[#allocation3 + $0x10] sm:$0xff] %vm951, %v908
      %955 = vst.msk [vmem:[#allocation3 + $0x18] sm:$0xff] %vm951, %v910
      %956 = vst.msk [vmem:[#allocation3 + $0x20] sm:$0xff] %vm951, %v912
      %957 = vst.msk [vmem:[#allocation3 + $0x28] sm:$0xff] %vm951, %v914
      %958 = vst.msk [vmem:[#allocation3 + $0x30] sm:$0xff] %vm951, %v916
      %959 = vst.msk [vmem:[#allocation3 + $0x38] sm:$0xff] %vm951, %v918
      %960 = vst.msk [vmem:[#allocation3 + $0x40] sm:$0xff] %vm951, %v920
      %961 = vst.msk [vmem:[#allocation3 + $0x48] sm:$0xff] %vm951, %v922
      %962 = vst.msk [vmem:[#allocation3 + $0x50] sm:$0xff] %vm951, %v924
      %963 = vst.msk [vmem:[#allocation3 + $0x58] sm:$0xff] %vm951, %v926
      %964 = vst.msk [vmem:[#allocation3 + $0x60] sm:$0xff] %vm951, %v928
      %965 = vst.msk [vmem:[#allocation3 + $0x68] sm:$0xff] %vm951, %v930
      %966 = vst.msk [vmem:[#allocation3 + $0x70] sm:$0xff] %vm951, %v932
      %967 = vst.msk [vmem:[#allocation3 + $0x78] sm:$0xff] %vm951, %v934
      %s968 = scalar_lea.vmem [#allocation2], 48
      %v969 = vld [vmem:[%s968] sm:$0xff]
      %v970 = vld [vmem:[%s968 + $0x8] sm:$0xff]
      %v971 = vld [vmem:[%s968 + $0x18] sm:$0xff]
      %v972 = vld [vmem:[%s968 + $0x20] sm:$0xff]
      %v973 = vld [vmem:[%s968 + $0x30] sm:$0xff]
      %v974 = vld [vmem:[%s968 + $0x38] sm:$0xff]
      %v975 = vld [vmem:[%s968 + $0x48] sm:$0xff]
      %v976 = vld [vmem:[%s968 + $0x50] sm:$0xff]
      %v977 = vld [vmem:[%s968 + $0x60] sm:$0xff]
      %v978 = vld [vmem:[%s968 + $0x68] sm:$0xff]
      %v979 = vld [vmem:[%s968 + $0x78] sm:$0xff]
      %v980 = vld [vmem:[%s968 + $0x80] sm:$0xff]
      %v981 = vld [vmem:[%s968 + $0x90] sm:$0xff]
      %v982 = vld [vmem:[%s968 + $0x98] sm:$0xff]
      %v983 = vld [vmem:[%s968 + $0xa8] sm:$0xff]
      %v984 = vld [vmem:[%s968 + $0xb0] sm:$0xff]
      %1001 = vrot.lane.b32.xlu0 %v969, 24
      %v1002 = vpop.permute.xlu0 %1001
      %1003 = vrot.lane.b32.xlu0 %v970, 24
      %v1004 = vpop.permute.xlu0 %1003
      %1005 = vrot.lane.b32.xlu0 %v971, 24
      %v1006 = vpop.permute.xlu0 %1005
      %1007 = vrot.lane.b32.xlu0 %v972, 24
      %v1008 = vpop.permute.xlu0 %1007
      %1009 = vrot.lane.b32.xlu0 %v973, 24
      %v1010 = vpop.permute.xlu0 %1009
      %1011 = vrot.lane.b32.xlu0 %v974, 24
      %v1012 = vpop.permute.xlu0 %1011
      %1013 = vrot.lane.b32.xlu0 %v975, 24
      %v1014 = vpop.permute.xlu0 %1013
      %1015 = vrot.lane.b32.xlu0 %v976, 24
      %v1016 = vpop.permute.xlu0 %1015
      %1017 = vrot.lane.b32.xlu0 %v977, 24
      %v1018 = vpop.permute.xlu0 %1017
      %1019 = vrot.lane.b32.xlu0 %v978, 24
      %v1020 = vpop.permute.xlu0 %1019
      %1021 = vrot.lane.b32.xlu0 %v979, 24
      %v1022 = vpop.permute.xlu0 %1021
      %1023 = vrot.lane.b32.xlu0 %v980, 24
      %v1024 = vpop.permute.xlu0 %1023
      %1025 = vrot.lane.b32.xlu0 %v981, 24
      %v1026 = vpop.permute.xlu0 %1025
      %1027 = vrot.lane.b32.xlu0 %v982, 24
      %v1028 = vpop.permute.xlu0 %1027
      %1029 = vrot.lane.b32.xlu0 %v983, 24
      %v1030 = vpop.permute.xlu0 %1029
      %1031 = vrot.lane.b32.xlu0 %v984, 24
      %v1032 = vpop.permute.xlu0 %1031
      %vm1049 = vcmask 228544
      %1050 = vst.msk [vmem:[#allocation3] sm:$0xff] %vm1049, %v1002
      %1051 = vst.msk [vmem:[#allocation3 + $0x8] sm:$0xff] %vm1049, %v1004
      %1052 = vst.msk [vmem:[#allocation3 + $0x10] sm:$0xff] %vm1049, %v1006
      %1053 = vst.msk [vmem:[#allocation3 + $0x18] sm:$0xff] %vm1049, %v1008
      %1054 = vst.msk [vmem:[#allocation3 + $0x20] sm:$0xff] %vm1049, %v1010
      %1055 = vst.msk [vmem:[#allocation3 + $0x28] sm:$0xff] %vm1049, %v1012
      %1056 = vst.msk [vmem:[#allocation3 + $0x30] sm:$0xff] %vm1049, %v1014
      %1057 = vst.msk [vmem:[#allocation3 + $0x38] sm:$0xff] %vm1049, %v1016
      %1058 = vst.msk [vmem:[#allocation3 + $0x40] sm:$0xff] %vm1049, %v1018
      %1059 = vst.msk [vmem:[#allocation3 + $0x48] sm:$0xff] %vm1049, %v1020
      %1060 = vst.msk [vmem:[#allocation3 + $0x50] sm:$0xff] %vm1049, %v1022
      %1061 = vst.msk [vmem:[#allocation3 + $0x58] sm:$0xff] %vm1049, %v1024
      %1062 = vst.msk [vmem:[#allocation3 + $0x60] sm:$0xff] %vm1049, %v1026
      %1063 = vst.msk [vmem:[#allocation3 + $0x68] sm:$0xff] %vm1049, %v1028
      %1064 = vst.msk [vmem:[#allocation3 + $0x70] sm:$0xff] %vm1049, %v1030
      %1065 = vst.msk [vmem:[#allocation3 + $0x78] sm:$0xff] %vm1049, %v1032
      %v1066 = vld [vmem:[%s968 + $0x1] sm:$0xff]
      %v1067 = vld [vmem:[%s968 + $0x9] sm:$0xff]
      %v1068 = vld [vmem:[%s968 + $0x19] sm:$0xff]
      %v1069 = vld [vmem:[%s968 + $0x21] sm:$0xff]
      %v1070 = vld [vmem:[%s968 + $0x31] sm:$0xff]
      %v1071 = vld [vmem:[%s968 + $0x39] sm:$0xff]
      %v1072 = vld [vmem:[%s968 + $0x49] sm:$0xff]
      %v1073 = vld [vmem:[%s968 + $0x51] sm:$0xff]
      %v1074 = vld [vmem:[%s968 + $0x61] sm:$0xff]
      %v1075 = vld [vmem:[%s968 + $0x69] sm:$0xff]
      %v1076 = vld [vmem:[%s968 + $0x79] sm:$0xff]
      %v1077 = vld [vmem:[%s968 + $0x81] sm:$0xff]
      %v1078 = vld [vmem:[%s968 + $0x91] sm:$0xff]
      %v1079 = vld [vmem:[%s968 + $0x99] sm:$0xff]
      %v1080 = vld [vmem:[%s968 + $0xa9] sm:$0xff]
      %v1081 = vld [vmem:[%s968 + $0xb1] sm:$0xff]
      %1098 = vrot.lane.b32.xlu0 %v1066, 28
      %v1099 = vpop.permute.xlu0 %1098
      %1100 = vrot.lane.b32.xlu0 %v1067, 28
      %v1101 = vpop.permute.xlu0 %1100
      %1102 = vrot.lane.b32.xlu0 %v1068, 28
      %v1103 = vpop.permute.xlu0 %1102
      %1104 = vrot.lane.b32.xlu0 %v1069, 28
      %v1105 = vpop.permute.xlu0 %1104
      %1106 = vrot.lane.b32.xlu0 %v1070, 28
      %v1107 = vpop.permute.xlu0 %1106
      %1108 = vrot.lane.b32.xlu0 %v1071, 28
      %v1109 = vpop.permute.xlu0 %1108
      %1110 = vrot.lane.b32.xlu0 %v1072, 28
      %v1111 = vpop.permute.xlu0 %1110
      %1112 = vrot.lane.b32.xlu0 %v1073, 28
      %v1113 = vpop.permute.xlu0 %1112
      %1114 = vrot.lane.b32.xlu0 %v1074, 28
      %v1115 = vpop.permute.xlu0 %1114
      %1116 = vrot.lane.b32.xlu0 %v1075, 28
      %v1117 = vpop.permute.xlu0 %1116
      %1118 = vrot.lane.b32.xlu0 %v1076, 28
      %v1119 = vpop.permute.xlu0 %1118
      %1120 = vrot.lane.b32.xlu0 %v1077, 28
      %v1121 = vpop.permute.xlu0 %1120
      %1122 = vrot.lane.b32.xlu0 %v1078, 28
      %v1123 = vpop.permute.xlu0 %1122
      %1124 = vrot.lane.b32.xlu0 %v1079, 28
      %v1125 = vpop.permute.xlu0 %1124
      %1126 = vrot.lane.b32.xlu0 %v1080, 28
      %v1127 = vpop.permute.xlu0 %1126
      %1128 = vrot.lane.b32.xlu0 %v1081, 28
      %v1129 = vpop.permute.xlu0 %1128
      %vm1146 = vcmask 261344
      %1147 = vst.msk [vmem:[#allocation3] sm:$0xff] %vm1146, %v1099
      %1148 = vst.msk [vmem:[#allocation3 + $0x8] sm:$0xff] %vm1146, %v1101
      %1149 = vst.msk [vmem:[#allocation3 + $0x10] sm:$0xff] %vm1146, %v1103
      %1150 = vst.msk [vmem:[#allocation3 + $0x18] sm:$0xff] %vm1146, %v1105
      %1151 = vst.msk [vmem:[#allocation3 + $0x20] sm:$0xff] %vm1146, %v1107
      %1152 = vst.msk [vmem:[#allocation3 + $0x28] sm:$0xff] %vm1146, %v1109
      %1153 = vst.msk [vmem:[#allocation3 + $0x30] sm:$0xff] %vm1146, %v1111
      %1154 = vst.msk [vmem:[#allocation3 + $0x38] sm:$0xff] %vm1146, %v1113
      %1155 = vst.msk [vmem:[#allocation3 + $0x40] sm:$0xff] %vm1146, %v1115
      %1156 = vst.msk [vmem:[#allocation3 + $0x48] sm:$0xff] %vm1146, %v1117
      %1157 = vst.msk [vmem:[#allocation3 + $0x50] sm:$0xff] %vm1146, %v1119
      %1158 = vst.msk [vmem:[#allocation3 + $0x58] sm:$0xff] %vm1146, %v1121
      %1159 = vst.msk [vmem:[#allocation3 + $0x60] sm:$0xff] %vm1146, %v1123
      %1160 = vst.msk [vmem:[#allocation3 + $0x68] sm:$0xff] %vm1146, %v1125
      %1161 = vst.msk [vmem:[#allocation3 + $0x70] sm:$0xff] %vm1146, %v1127
      %1162 = vst.msk [vmem:[#allocation3 + $0x78] sm:$0xff] %vm1146, %v1129
      %v1163 = vld [vmem:[%s968 + $0x2] sm:$0xff]
      %v1164 = vld [vmem:[%s968 + $0xa] sm:$0xff]
      %v1165 = vld [vmem:[%s968 + $0x1a] sm:$0xff]
      %v1166 = vld [vmem:[%s968 + $0x22] sm:$0xff]
      %v1167 = vld [vmem:[%s968 + $0x32] sm:$0xff]
      %v1168 = vld [vmem:[%s968 + $0x3a] sm:$0xff]
      %v1169 = vld [vmem:[%s968 + $0x4a] sm:$0xff]
      %v1170 = vld [vmem:[%s968 + $0x52] sm:$0xff]
      %v1171 = vld [vmem:[%s968 + $0x62] sm:$0xff]
      %v1172 = vld [vmem:[%s968 + $0x6a] sm:$0xff]
      %v1173 = vld [vmem:[%s968 + $0x7a] sm:$0xff]
      %v1174 = vld [vmem:[%s968 + $0x82] sm:$0xff]
      %v1175 = vld [vmem:[%s968 + $0x92] sm:$0xff]
      %v1176 = vld [vmem:[%s968 + $0x9a] sm:$0xff]
      %v1177 = vld [vmem:[%s968 + $0xaa] sm:$0xff]
      %v1178 = vld [vmem:[%s968 + $0xb2] sm:$0xff]
      %1195 = vrot.lane.b32.xlu0 %v1163, 32
      %v1196 = vpop.permute.xlu0 %1195
      %1197 = vrot.lane.b32.xlu0 %v1164, 32
      %v1198 = vpop.permute.xlu0 %1197
      %1199 = vrot.lane.b32.xlu0 %v1165, 32
      %v1200 = vpop.permute.xlu0 %1199
      %1201 = vrot.lane.b32.xlu0 %v1166, 32
      %v1202 = vpop.permute.xlu0 %1201
      %1203 = vrot.lane.b32.xlu0 %v1167, 32
      %v1204 = vpop.permute.xlu0 %1203
      %1205 = vrot.lane.b32.xlu0 %v1168, 32
      %v1206 = vpop.permute.xlu0 %1205
      %1207 = vrot.lane.b32.xlu0 %v1169, 32
      %v1208 = vpop.permute.xlu0 %1207
      %1209 = vrot.lane.b32.xlu0 %v1170, 32
      %v1210 = vpop.permute.xlu0 %1209
      %1211 = vrot.lane.b32.xlu0 %v1171, 32
      %v1212 = vpop.permute.xlu0 %1211
      %1213 = vrot.lane.b32.xlu0 %v1172, 32
      %v1214 = vpop.permute.xlu0 %1213
      %1215 = vrot.lane.b32.xlu0 %v1173, 32
      %v1216 = vpop.permute.xlu0 %1215
      %1217 = vrot.lane.b32.xlu0 %v1174, 32
      %v1218 = vpop.permute.xlu0 %1217
      %1219 = vrot.lane.b32.xlu0 %v1175, 32
      %v1220 = vpop.permute.xlu0 %1219
      %1221 = vrot.lane.b32.xlu0 %v1176, 32
      %v1222 = vpop.permute.xlu0 %1221
      %1223 = vrot.lane.b32.xlu0 %v1177, 32
      %v1224 = vpop.permute.xlu0 %1223
      %1225 = vrot.lane.b32.xlu0 %v1178, 32
      %v1226 = vpop.permute.xlu0 %1225
      %vm1243 = vcmask 294144
      %1244 = vst.msk [vmem:[#allocation3] sm:$0xff] %vm1243, %v1196
      %1245 = vst.msk [vmem:[#allocation3 + $0x8] sm:$0xff] %vm1243, %v1198
      %1246 = vst.msk [vmem:[#allocation3 + $0x10] sm:$0xff] %vm1243, %v1200
      %1247 = vst.msk [vmem:[#allocation3 + $0x18] sm:$0xff] %vm1243, %v1202
      %1248 = vst.msk [vmem:[#allocation3 + $0x20] sm:$0xff] %vm1243, %v1204
      %1249 = vst.msk [vmem:[#allocation3 + $0x28] sm:$0xff] %vm1243, %v1206
      %1250 = vst.msk [vmem:[#allocation3 + $0x30] sm:$0xff] %vm1243, %v1208
      %1251 = vst.msk [vmem:[#allocation3 + $0x38] sm:$0xff] %vm1243, %v1210
      %1252 = vst.msk [vmem:[#allocation3 + $0x40] sm:$0xff] %vm1243, %v1212
      %1253 = vst.msk [vmem:[#allocation3 + $0x48] sm:$0xff] %vm1243, %v1214
      %1254 = vst.msk [vmem:[#allocation3 + $0x50] sm:$0xff] %vm1243, %v1216
      %1255 = vst.msk [vmem:[#allocation3 + $0x58] sm:$0xff] %vm1243, %v1218
      %1256 = vst.msk [vmem:[#allocation3 + $0x60] sm:$0xff] %vm1243, %v1220
      %1257 = vst.msk [vmem:[#allocation3 + $0x68] sm:$0xff] %vm1243, %v1222
      %1258 = vst.msk [vmem:[#allocation3 + $0x70] sm:$0xff] %vm1243, %v1224
      %1259 = vst.msk [vmem:[#allocation3 + $0x78] sm:$0xff] %vm1243, %v1226
      %v1260 = vld [vmem:[#allocation3] sm:$0xff]
      %v1261 = vld [vmem:[#allocation3 + $0x8] sm:$0xff]
      %v1262 = vld [vmem:[#allocation3 + $0x10] sm:$0xff]
      %v1263 = vld [vmem:[#allocation3 + $0x18] sm:$0xff]
      %v1264 = vld [vmem:[#allocation3 + $0x20] sm:$0xff]
      %v1265 = vld [vmem:[#allocation3 + $0x28] sm:$0xff]
      %v1266 = vld [vmem:[#allocation3 + $0x30] sm:$0xff]
      %v1267 = vld [vmem:[#allocation3 + $0x38] sm:$0xff]
      %v1268 = vld [vmem:[#allocation3 + $0x40] sm:$0xff]
      %v1269 = vld [vmem:[#allocation3 + $0x48] sm:$0xff]
      %v1270 = vld [vmem:[#allocation3 + $0x50] sm:$0xff]
      %v1271 = vld [vmem:[#allocation3 + $0x58] sm:$0xff]
      %v1272 = vld [vmem:[#allocation3 + $0x60] sm:$0xff]
      %v1273 = vld [vmem:[#allocation3 + $0x68] sm:$0xff]
      %v1274 = vld [vmem:[#allocation3 + $0x70] sm:$0xff]
      %v1275 = vld [vmem:[#allocation3 + $0x78] sm:$0xff]
      %v1276 = vld [vmem:[%s3] sm:$0xff]
      %v1277 = vld [vmem:[%s3 + $0x8] sm:$0xff]
      %v1278 = vld [vmem:[%s3 + $0x10] sm:$0xff]
      %v1279 = vld [vmem:[%s3 + $0x18] sm:$0xff]
      %v1280 = vld [vmem:[%s3 + $0x20] sm:$0xf]
      %vm1281 = vcmask 293888
      %v1283 = vsel %vm1281, %v1260, 0
      %v1286 = vsel %vm1281, %v1261, 0
      %v1289 = vsel %vm1281, %v1262, 0
      %v1292 = vsel %vm1281, %v1263, 0
      %v1295 = vsel %vm1281, %v1264, 0
      %v1298 = vsel %vm1281, %v1265, 0
      %v1301 = vsel %vm1281, %v1266, 0
      %v1304 = vsel %vm1281, %v1267, 0
      %v1307 = vsel %vm1281, %v1268, 0
      %v1310 = vsel %vm1281, %v1269, 0
      %v1313 = vsel %vm1281, %v1270, 0
      %v1316 = vsel %vm1281, %v1271, 0
      %v1319 = vsel %vm1281, %v1272, 0
      %v1322 = vsel %vm1281, %v1273, 0
      %v1325 = vsel %vm1281, %v1274, 0
      %v1328 = vsel %vm1281, %v1275, 0
      %vm1330 = vcmask 1043456
      %v1332 = vsel %vm1330, %v1280, 0
      %1334 = vmatprep.subr.mxu0 0.0
      %1335 = vmatpush1.msra.mxu0 %v1276
      %1336 = vmatprep.subr.mxu0 0.0
      %1337 = vmatpush1.msra.mxu0 %v1277
      %1338 = vmatprep.subr.mxu0 0.0
      %1339 = vmatpush1.msra.mxu0 %v1278
      %1340 = vmatprep.subr.mxu0 0.0
      %1341 = vmatpush1.msra.mxu0 %v1279
      %1342 = vmatprep.subr.mxu0 0.0
      %1343 = vmatpush1.msra.mxu0 %v1332
      %1344 = vmatprep.subr.mxu0 0.0
      %1345 = vmatpush1.msra.mxu0 0.0
      %1346 = vmatprep.subr.mxu0 0.0
      %1347 = vmatpush1.msra.mxu0 0.0
      %1348 = vmatprep.subr.mxu0 0.0
      %1349 = vmatpush1.msra.mxu0 0.0
      %1350 = vmatprep.subr.mxu0 0.0
      %1351 = vmatpush1.msra.mxu0 0.0
      %1352 = vmatprep.subr.mxu0 0.0
      %1353 = vmatpush1.msra.mxu0 0.0
      %1354 = vmatprep.subr.mxu0 0.0
      %1355 = vmatpush1.msra.mxu0 0.0
      %1356 = vmatprep.subr.mxu0 0.0
      %1357 = vmatpush1.msra.mxu0 0.0
      %1358 = vmatprep.subr.mxu0 0.0
      %1359 = vmatpush1.msra.mxu0 0.0
      %1360 = vmatprep.subr.mxu0 0.0
      %1361 = vmatpush1.msra.mxu0 0.0
      %1362 = vmatprep.subr.mxu0 0.0
      %1363 = vmatpush1.msra.mxu0 0.0
      %1364 = vmatprep.subr.mxu0 0.0
      %1365 = vmatpush1.msra.mxu0 0.0
      %1366 = vmatprep.subr.mxu0 0.0
      %1367 = vmatpush1.msra.mxu0 0.0
      %1368 = vmatprep.subr.mxu0 0.0
      %1369 = vmatpush1.msra.mxu0 0.0
      %1370 = vmatprep.subr.mxu0 0.0
      %1371 = vmatpush1.msra.mxu0 0.0
      %1372 = vmatprep.subr.mxu0 0.0
      %1373 = vmatpush1.msra.mxu0 0.0
      %1374 = vmatprep.subr.mxu0 0.0
      %1375 = vmatpush1.msra.mxu0 0.0
      %1376 = vmatprep.subr.mxu0 0.0
      %1377 = vmatpush1.msra.mxu0 0.0
      %1378 = vmatprep.subr.mxu0 0.0
      %1379 = vmatpush1.msra.mxu0 0.0
      %1380 = vmatprep.subr.mxu0 0.0
      %1381 = vmatpush1.msra.mxu0 0.0
      %1382 = vmatprep.subr.mxu0 0.0
      %1383 = vmatpush1.msra.mxu0 0.0
      %1384 = vmatprep.subr.mxu0 0.0
      %1385 = vmatpush1.msra.mxu0 0.0
      %1386 = vmatprep.subr.mxu0 0.0
      %1387 = vmatpush1.msra.mxu0 0.0
      %1388 = vmatprep.subr.mxu0 0.0
      %1389 = vmatpush1.msra.mxu0 0.0
      %1390 = vmatprep.subr.mxu0 0.0
      %1391 = vmatpush1.msra.mxu0 0.0
      %1392 = vmatprep.subr.mxu0 0.0
      %1393 = vmatpush1.msra.mxu0 0.0
      %1394 = vmatprep.subr.mxu0 0.0
      %1395 = vmatpush1.msra.mxu0 0.0
      %1396 = vmatprep.subr.mxu0 0.0
      %1397 = vmatpush1.msra.mxu0 0.0
      %1398 = vmatprep.mubr.f32.mxu0 0.0
      %1399 = vmatmul.mubr.f32.gmra.mrb[0].mxu0 %v1283
      %v1400 = vpop.f32.mrb[0].mxu0
      %v1401 = vadd.f32 0.0, %v1400
      %v1402 = vpop.f32.mrb[0].mxu0
      %1403 = vmatprep.mubr.f32.mxu0 0.0
      %1404 = vmatmul.mubr.f32.gmra.mrb[0].mxu0 %v1286
      %v1405 = vpop.f32.mrb[0].mxu0
      %v1406 = vadd.f32 0.0, %v1405
      %v1407 = vpop.f32.mrb[0].mxu0
      %1408 = vmatprep.mubr.f32.mxu0 0.0
      %1409 = vmatmul.mubr.f32.gmra.mrb[0].mxu0 %v1289
      %v1410 = vpop.f32.mrb[0].mxu0
      %v1411 = vadd.f32 0.0, %v1410
      %v1412 = vpop.f32.mrb[0].mxu0
      %1413 = vmatprep.mubr.f32.mxu0 0.0
      %1414 = vmatmul.mubr.f32.gmra.mrb[0].mxu0 %v1292
      %v1415 = vpop.f32.mrb[0].mxu0
      %v1416 = vadd.f32 0.0, %v1415
      %v1417 = vpop.f32.mrb[0].mxu0
      %1418 = vmatprep.mubr.f32.mxu0 0.0
      %1419 = vmatmul.mubr.f32.gmra.mrb[0].mxu0 %v1295
      %v1420 = vpop.f32.mrb[0].mxu0
      %v1421 = vadd.f32 0.0, %v1420
      %v1422 = vpop.f32.mrb[0].mxu0
      %1423 = vmatprep.mubr.f32.mxu0 0.0
      %1424 = vmatmul.mubr.f32.gmra.mrb[0].mxu0 %v1298
      %v1425 = vpop.f32.mrb[0].mxu0
      %v1426 = vadd.f32 0.0, %v1425
      %v1427 = vpop.f32.mrb[0].mxu0
      %1428 = vmatprep.mubr.f32.mxu0 0.0
      %1429 = vmatmul.mubr.f32.gmra.mrb[0].mxu0 %v1301
      %v1430 = vpop.f32.mrb[0].mxu0
      %v1431 = vadd.f32 0.0, %v1430
      %v1432 = vpop.f32.mrb[0].mxu0
      %1433 = vmatprep.mubr.f32.mxu0 0.0
      %1434 = vmatmul.mubr.f32.gmra.mrb[0].mxu0 %v1304
      %v1435 = vpop.f32.mrb[0].mxu0
      %v1436 = vadd.f32 0.0, %v1435
      %v1437 = vpop.f32.mrb[0].mxu0
      %1438 = vmatprep.mubr.f32.mxu0 0.0
      %1439 = vmatmul.mubr.f32.gmra.mrb[0].mxu0 %v1307
      %v1440 = vpop.f32.mrb[0].mxu0
      %v1441 = vadd.f32 0.0, %v1440
      %v1442 = vpop.f32.mrb[0].mxu0
      %1443 = vmatprep.mubr.f32.mxu0 0.0
      %1444 = vmatmul.mubr.f32.gmra.mrb[0].mxu0 %v1310
      %v1445 = vpop.f32.mrb[0].mxu0
      %v1446 = vadd.f32 0.0, %v1445
      %v1447 = vpop.f32.mrb[0].mxu0
      %1448 = vmatprep.mubr.f32.mxu0 0.0
      %1449 = vmatmul.mubr.f32.gmra.mrb[0].mxu0 %v1313
      %v1450 = vpop.f32.mrb[0].mxu0
      %v1451 = vadd.f32 0.0, %v1450
      %v1452 = vpop.f32.mrb[0].mxu0
      %1453 = vmatprep.mubr.f32.mxu0 0.0
      %1454 = vmatmul.mubr.f32.gmra.mrb[0].mxu0 %v1316
      %v1455 = vpop.f32.mrb[0].mxu0
      %v1456 = vadd.f32 0.0, %v1455
      %v1457 = vpop.f32.mrb[0].mxu0
      %1458 = vmatprep.mubr.f32.mxu0 0.0
      %1459 = vmatmul.mubr.f32.gmra.mrb[0].mxu0 %v1319
      %v1460 = vpop.f32.mrb[0].mxu0
      %v1461 = vadd.f32 0.0, %v1460
      %v1462 = vpop.f32.mrb[0].mxu0
      %1463 = vmatprep.mubr.f32.mxu0 0.0
      %1464 = vmatmul.mubr.f32.gmra.mrb[0].mxu0 %v1322
      %v1465 = vpop.f32.mrb[0].mxu0
      %v1466 = vadd.f32 0.0, %v1465
      %v1467 = vpop.f32.mrb[0].mxu0
      %1468 = vmatprep.mubr.f32.mxu0 0.0
      %1469 = vmatmul.mubr.f32.gmra.mrb[0].mxu0 %v1325
      %v1470 = vpop.f32.mrb[0].mxu0
      %v1471 = vadd.f32 0.0, %v1470
      %v1472 = vpop.f32.mrb[0].mxu0
      %1473 = vmatprep.mubr.f32.mxu0 0.0
      %1474 = vmatmul.mubr.f32.gmra.mrb[0].mxu0 %v1328
      %v1475 = vpop.f32.mrb[0].mxu0
      %v1476 = vadd.f32 0.0, %v1475
      %v1477 = vpop.f32.mrb[0].mxu0
      %1478 = vdwg.mxu0
      %vm1479 = vcmask 15360
      %1480 = vst.msk [vmem:[%s364] sm:$0xff] %vm1479, %v1401
      %1481 = vst.msk [vmem:[%s364 + $0x8] sm:$0xff] %vm1479, %v1406
      %1482 = vst.msk [vmem:[%s364 + $0x10] sm:$0xff] %vm1479, %v1411
      %1483 = vst.msk [vmem:[%s364 + $0x18] sm:$0xff] %vm1479, %v1416
      %1484 = vst.msk [vmem:[%s364 + $0x20] sm:$0xff] %vm1479, %v1421
      %1485 = vst.msk [vmem:[%s364 + $0x28] sm:$0xff] %vm1479, %v1426
      %1486 = vst.msk [vmem:[%s364 + $0x30] sm:$0xff] %vm1479, %v1431
      %1487 = vst.msk [vmem:[%s364 + $0x38] sm:$0xff] %vm1479, %v1436
      %1488 = vst.msk [vmem:[%s364 + $0x40] sm:$0xff] %vm1479, %v1441
      %1489 = vst.msk [vmem:[%s364 + $0x48] sm:$0xff] %vm1479, %v1446
      %1490 = vst.msk [vmem:[%s364 + $0x50] sm:$0xff] %vm1479, %v1451
      %1491 = vst.msk [vmem:[%s364 + $0x58] sm:$0xff] %vm1479, %v1456
      %1492 = vst.msk [vmem:[%s364 + $0x60] sm:$0xff] %vm1479, %v1461
      %1493 = vst.msk [vmem:[%s364 + $0x68] sm:$0xff] %vm1479, %v1466
      %1494 = vst.msk [vmem:[%s364 + $0x70] sm:$0xff] %vm1479, %v1471
      %1495 = vst.msk [vmem:[%s364 + $0x78] sm:$0xff] %vm1479, %v1476
      %s1496 = smul.u32 8, %s20
      %p1497 = scmp.lt.s32.totalorder %s19, 1
      %s1498 = scalar_select %p1497, %s19, 1
      %p1499 = scmp.lt.s32.totalorder %s1496, 15
      %s1500 = scalar_select %p1499, %s1496, 15
      %s1501 = smul.addr %s1500, 2
      %s1502 = smul.addr %s1498, 32
      %s1503 = sadd.s32 %s1501, %s1502
      %s1504 = smul.addr %s1503, 8
      %s1505 = scalar_lea.vmem %s4, %s1504
      // Predicated region
      $region53: #{tpu_custom_call.1} parent=35 // pred_check
        %p1506 = pneg %p168
      $region54: #{tpu_custom_call.1} parent=35 // pred_check_branch
        %1508 = sbr.rel (%p1506) target = $region56
      $region55: #{tpu_custom_call.1} parent=35 // pred_region
        %s1509 = smul.u32 8, %s20
      $region56: #{tpu_custom_call.1} parent=35 // pred_fallthru
        _
    $region36: #{tpu_custom_call.1} parent=5 // pred_fallthru
      _
    %p1510 = scmp.le.s32.totalorder 2, %s10
    // Predicated region
    $region57: #{tpu_custom_call.1} parent=5 // pred_check
      %p1511 = pneg %p1510
    $region58: #{tpu_custom_call.1} parent=5 // pred_check_branch
      %1513 = sbr.rel (%p1511) target = $region60
    $region59: #{tpu_custom_call.1} parent=5 // pred_region
      %s1514 = ssub.s32 %s10, 2
      // Predicated region
      $region61: #{tpu_custom_call.1} parent=59 // pred_check
        %p1515 = pneg %p174
      $region62: #{tpu_custom_call.1} parent=59 // pred_check_branch
        %1517 = sbr.rel (%p1515) target = $region64
      $region63: #{tpu_custom_call.1} parent=59 // pred_region
        %s1518 = smul.u32 8, %s22
        %p1519 = scmp.lt.s32.totalorder %s21, 1
        %s1520 = scalar_select %p1519, %s21, 1
        %p1521 = scmp.lt.s32.totalorder %s1518, 15
        %s1522 = scalar_select %p1521, %s1518, 15
        %s1523 = smul.addr %s1522, 2
        %s1524 = smul.addr %s1520, 32
        %s1525 = sadd.s32 %s1523, %s1524
        %s1526 = smul.addr %s1525, 8
        %s1527 = scalar_lea.vmem %s4, %s1526
      $region64: #{tpu_custom_call.1} parent=59 // pred_fallthru
        _
    $region60: #{tpu_custom_call.1} parent=5 // pred_fallthru
      _
  $region6: #{tpu_custom_call.1} parent=0 // loop_footer
    %s14 = sadd.s32 1, %s10
  $region7: #{tpu_custom_call.1} parent=0 // loop_footer_branch
    %9 = sbr.rel target = $region3
  $region8: #{tpu_custom_call.1} parent=0 // loop_exit
    _

</llo_original>
